<compile_context>
chip_gen: v5e
topology: v5e:2x2
jax: 0.10.0
libtpu: 0.0.40
codegen_flags: <defaults>
</compile_context>

<pallas_src>
import jax
import jax.numpy as jnp
import numpy as np
from jax import lax
from jax.experimental import pallas as pl
from jax.experimental.pallas import tpu as pltpu


def _down_kernel(x_ref, w1_ref, s1_ref, b1_ref, w2_ref, s2_ref, b2_ref,
                 o_ref, pad1_ref, pad2_ref):
    """One batch element per grid step.  x_ref block is (1, H, W/2, 2*Cin)."""
    _, H, W2, C2 = x_ref.shape
    Cin = C2 // 2
    H2 = H // 2
    Cmid = w1_ref.shape[-1]
    Cout = w2_ref.shape[-1]

    # ---- MaxPool2d(2) from a single read of the input block ------------------------
    xr = x_ref[0]                                        # (H, W2, 2*Cin)
    # horizontal pool: partner pixel's channels live in the upper half of the lane dim
    xw = jnp.maximum(xr[:, :, :Cin], xr[:, :, Cin:])     # (H, W2, Cin)
    # vertical pool: split the leading (untiled) dim and max the two row phases
    xh = xw.reshape(H2, 2, W2, Cin)
    pooled = jnp.maximum(xh[:, 0], xh[:, 1])             # (H2, W2, Cin)

    # ---- zero only the 1-pixel borders of the padded scratch buffers ---------------
    # (interiors are fully overwritten below, so full re-zeroing would be wasted work)
    def zero_border(pad_ref, c):
        zrow = jnp.zeros((1, W2 + 2, c), jnp.float32)
        zcol = jnp.zeros((H2 + 2, 1, c), jnp.float32)
        pad_ref[0:1, :, :] = zrow
        pad_ref[H2 + 1:H2 + 2, :, :] = zrow
        pad_ref[:, 0:1, :] = zcol
        pad_ref[:, W2 + 1:W2 + 2, :] = zcol

    zero_border(pad1_ref, Cin)
    zero_border(pad2_ref, Cmid)

    # ---- conv3x3(pad=1, no bias) -> folded BN -> ReLU as ONE im2col MXU matmul ------
    def conv_bn_relu(pad_ref, w_ref, s_ref, b_ref, cin):
        # im2col: concatenate the nine shifted windows along the channel (lane) dim
        patches = jnp.concatenate(
            [pad_ref[dy:dy + H2, dx:dx + W2, :].reshape(H2 * W2, cin)
             for dy in range(3) for dx in range(3)],
            axis=1)                                       # (H2*W2, 9*cin)
        y = jnp.dot(patches, w_ref[...],
                    preferred_element_type=jnp.float32)   # single MXU call
        y = y * s_ref[...] + b_ref[...]                   # folded BatchNorm (eval)
        return jnp.maximum(y, 0.0)                        # ReLU, (H2*W2, cout)

    pad1_ref[1:H2 + 1, 1:W2 + 1, :] = pooled
    h1 = conv_bn_relu(pad1_ref, w1_ref, s1_ref, b1_ref, Cin)
    # write conv1's output straight into conv2's padded scratch interior
    pad2_ref[1:H2 + 1, 1:W2 + 1, :] = h1.reshape(H2, W2, Cmid)
    h2 = conv_bn_relu(pad2_ref, w2_ref, s2_ref, b2_ref, Cmid)
    o_ref[0] = h2.reshape(H2, W2, Cout)


def down_forward(x_nchw, params):
    """Down.forward: NCHW in, NCHW out (kernel runs in NHWC)."""
    w1, s1, b1, w2, s2, b2 = params
    x = jnp.transpose(x_nchw, (0, 2, 3, 1)).astype(jnp.float32)   # NHWC
    N, H, W, Cin = x.shape
    H2, W2 = H // 2, W // 2
    Cmid = w1.shape[-1]
    Cout = w2.shape[-1]

    # free bitcast reshape: pack each horizontal pixel pair's channels on the lane dim
    x_packed = x.reshape(N, H, W2, 2 * Cin)

    out_nhwc = pl.pallas_call(
        _down_kernel,
        out_shape=jax.ShapeDtypeStruct((N, H2, W2, Cout), jnp.float32),
        grid=(N,),
        in_specs=[
            pl.BlockSpec((1, H, W2, 2 * Cin), lambda n: (n, 0, 0, 0)),
            pl.BlockSpec((9 * Cin, Cmid), lambda n: (0, 0)),
            pl.BlockSpec((1, Cmid), lambda n: (0, 0)),
            pl.BlockSpec((1, Cmid), lambda n: (0, 0)),
            pl.BlockSpec((9 * Cmid, Cout), lambda n: (0, 0)),
            pl.BlockSpec((1, Cout), lambda n: (0, 0)),
            pl.BlockSpec((1, Cout), lambda n: (0, 0)),
        ],
        out_specs=pl.BlockSpec((1, H2, W2, Cout), lambda n: (n, 0, 0, 0)),
        scratch_shapes=[
            pltpu.VMEM((H2 + 2, W2 + 2, Cin), jnp.float32),
            pltpu.VMEM((H2 + 2, W2 + 2, Cmid), jnp.float32),
        ],
        compiler_params=pltpu.CompilerParams(
            dimension_semantics=("parallel",)),
    )(x_packed, w1, s1, b1, w2, s2, b2)

    return jnp.transpose(out_nhwc, (0, 3, 1, 2))  # back to NCHW


def down_reference(x_nchw, params):
    """Pure-JAX (lax) reference for correctness checking."""
    w1, s1, b1, w2, s2, b2 = params
    x = jnp.transpose(x_nchw, (0, 2, 3, 1)).astype(jnp.float32)
    pooled = lax.reduce_window(x, -jnp.inf, lax.max,
                               (1, 2, 2, 1), (1, 2, 2, 1), 'VALID')

    def conv_bn_relu(h, wmat, s, b):
        cin = wmat.shape[0] // 9
        cout = wmat.shape[1]
        w = wmat.reshape(3, 3, cin, cout)  # HWIO
        y = lax.conv_general_dilated(h, w, (1, 1), 'SAME',
                                     dimension_numbers=('NHWC', 'HWIO', 'NHWC'))
        y = y * s.reshape(1, 1, 1, -1) + b.reshape(1, 1, 1, -1)
        return jnp.maximum(y, 0.0)

    h = conv_bn_relu(pooled, w1, s1, b1)
    h = conv_bn_relu(h, w2, s2, b2)
    return jnp.transpose(h, (0, 3, 1, 2))


def make_params(key, in_channels, out_channels):
    """Deterministic synthetic parameters (Conv2d weights + folded BatchNorm)."""
    mid_channels = out_channels  # DoubleConv default: mid = out
    ks = jax.random.split(key, 10)
    eps = 1e-5

    def bn_fold(kg, kb, km, kv, c):
        gamma = 1.0 + 0.1 * jax.random.normal(kg, (c,), jnp.float32)
        beta = 0.1 * jax.random.normal(kb, (c,), jnp.float32)
        mean = 0.1 * jax.random.normal(km, (c,), jnp.float32)
        var = jax.random.uniform(kv, (c,), jnp.float32, 0.5, 1.5)
        scale = gamma / jnp.sqrt(var + eps)
        shift = beta - mean * scale
        return scale.reshape(1, c), shift.reshape(1, c)

    # conv weights stored as (kh*kw*Cin, Cout)  ==  HWIO reshaped for im2col matmul
    w1 = 0.3 * jax.random.normal(ks[0], (9 * in_channels, mid_channels), jnp.float32)
    s1, b1 = bn_fold(ks[1], ks[2], ks[3], ks[4], mid_channels)
    w2 = 0.3 * jax.random.normal(ks[5], (9 * mid_channels, out_channels), jnp.float32)
    s2, b2 = bn_fold(ks[6], ks[7], ks[8], ks[9], out_channels)
    return (w1, s1, b1, w2, s2, b2)


if __name__ == "__main__":
    key = jax.random.PRNGKey(0)
    k_x, k_p = jax.random.split(key)

    N, Cin, H, W = 2, 4, 16, 16
    Cout = 8
    x = jax.random.normal(k_x, (N, Cin, H, W), jnp.float32)   # NCHW, like PyTorch
    params = make_params(k_p, Cin, Cout)

    out = jax.block_until_ready(down_forward(x, params))
    ref = jax.block_until_ready(down_reference(x, params))

    assert out.shape == (N, Cout, H // 2, W // 2), out.shape
    np.testing.assert_allclose(np.asarray(out), np.asarray(ref), rtol=1e-3, atol=1e-3)
    print("KERNEL_OK")
</pallas_src>

<mosaic_0001>
module attributes {stable_mosaic.version = 11 : i64} {
  func.func @_down_kernel(%arg0: i32, %arg1: memref<1x16x8x8xf32, #tpu.memory_space<vmem>>, %arg2: memref<36x8xf32, #tpu.memory_space<vmem>>, %arg3: memref<1x8xf32, #tpu.memory_space<vmem>>, %arg4: memref<1x8xf32, #tpu.memory_space<vmem>>, %arg5: memref<72x8xf32, #tpu.memory_space<vmem>>, %arg6: memref<1x8xf32, #tpu.memory_space<vmem>>, %arg7: memref<1x8xf32, #tpu.memory_space<vmem>>, %arg8: memref<1x8x8x8xf32, #tpu.memory_space<vmem>>, %arg9: memref<10x10x4xf32, #tpu.memory_space<vmem>>, %arg10: memref<10x10x8xf32, #tpu.memory_space<vmem>>) attributes {dimension_semantics = [#tpu.dimension_semantics<parallel>], iteration_bounds = array<i64: 2>, scalar_prefetch = 0 : i64, scratch_operands = 2 : i64, tpu.core_type = #tpu.core_type<tc>, window_params = [{transform_indices = @transform_0, window_bounds = array<i64: 1, 16, 8, 8>}, {pipeline_mode = #tpu.pipeline_mode<synchronous>, transform_indices = @transform_1, window_bounds = array<i64: 36, 8>}, {pipeline_mode = #tpu.pipeline_mode<synchronous>, transform_indices = @transform_2, window_bounds = array<i64: 1, 8>}, {pipeline_mode = #tpu.pipeline_mode<synchronous>, transform_indices = @transform_3, window_bounds = array<i64: 1, 8>}, {pipeline_mode = #tpu.pipeline_mode<synchronous>, transform_indices = @transform_4, window_bounds = array<i64: 72, 8>}, {pipeline_mode = #tpu.pipeline_mode<synchronous>, transform_indices = @transform_5, window_bounds = array<i64: 1, 8>}, {pipeline_mode = #tpu.pipeline_mode<synchronous>, transform_indices = @transform_6, window_bounds = array<i64: 1, 8>}, {transform_indices = @transform_7, window_bounds = array<i64: 1, 8, 8, 8>}]} {
    %c0 = arith.constant 0 : index
    %c0_0 = arith.constant 0 : index
    %c0_1 = arith.constant 0 : index
    %c0_2 = arith.constant 0 : index
    %0 = vector.load %arg1[%c0, %c0_0, %c0_1, %c0_2] : memref<1x16x8x8xf32, #tpu.memory_space<vmem>>, vector<1x16x8x8xf32>
    %1 = vector.shape_cast %0 : vector<1x16x8x8xf32> to vector<16x8x8xf32>
    %2 = vector.extract_strided_slice %1 {offsets = [0, 0, 0], sizes = [16, 8, 4], strides = [1, 1, 1]} : vector<16x8x8xf32> to vector<16x8x4xf32>
    %3 = vector.extract_strided_slice %1 {offsets = [0, 0, 4], sizes = [16, 8, 4], strides = [1, 1, 1]} : vector<16x8x8xf32> to vector<16x8x4xf32>
    %4 = arith.maximumf %2, %3 : vector<16x8x4xf32>
    %5 = vector.shape_cast %4 : vector<16x8x4xf32> to vector<8x2x8x4xf32>
    %6 = vector.extract_strided_slice %5 {offsets = [0, 0, 0, 0], sizes = [8, 1, 8, 4], strides = [1, 1, 1, 1]} : vector<8x2x8x4xf32> to vector<8x1x8x4xf32>
    %7 = vector.shape_cast %6 : vector<8x1x8x4xf32> to vector<8x8x4xf32>
    %8 = vector.extract_strided_slice %5 {offsets = [0, 1, 0, 0], sizes = [8, 1, 8, 4], strides = [1, 1, 1, 1]} : vector<8x2x8x4xf32> to vector<8x1x8x4xf32>
    %9 = vector.shape_cast %8 : vector<8x1x8x4xf32> to vector<8x8x4xf32>
    %10 = arith.maximumf %7, %9 : vector<8x8x4xf32>
    %cst = arith.constant 0.000000e+00 : f32
    %11 = vector.broadcast %cst : f32 to vector<1x10x4xf32>
    %cst_3 = arith.constant 0.000000e+00 : f32
    %12 = vector.broadcast %cst_3 : f32 to vector<10x1x4xf32>
    %c0_4 = arith.constant 0 : index
    %c0_5 = arith.constant 0 : index
    %c0_6 = arith.constant 0 : index
    %13 = vector.load %arg9[%c0_4, %c0_5, %c0_6] : memref<10x10x4xf32, #tpu.memory_space<vmem>>, vector<1x10x4xf32>
    tpu.vector_store %arg9[%c0_4, %c0_5, %c0_6], %11 {strides = array<i32>} : memref<10x10x4xf32, #tpu.memory_space<vmem>>, vector<1x10x4xf32>,
    %c9 = arith.constant 9 : index
    %c0_7 = arith.constant 0 : index
    %c0_8 = arith.constant 0 : index
    %14 = vector.load %arg9[%c9, %c0_7, %c0_8] : memref<10x10x4xf32, #tpu.memory_space<vmem>>, vector<1x10x4xf32>
    tpu.vector_store %arg9[%c9, %c0_7, %c0_8], %11 {strides = array<i32>} : memref<10x10x4xf32, #tpu.memory_space<vmem>>, vector<1x10x4xf32>,
    %c0_9 = arith.constant 0 : index
    %c0_10 = arith.constant 0 : index
    %c0_11 = arith.constant 0 : index
    %15 = vector.load %arg9[%c0_9, %c0_10, %c0_11] : memref<10x10x4xf32, #tpu.memory_space<vmem>>, vector<10x1x4xf32>
    tpu.vector_store %arg9[%c0_9, %c0_10, %c0_11], %12 {strides = array<i32>} : memref<10x10x4xf32, #tpu.memory_space<vmem>>, vector<10x1x4xf32>,
    %c0_12 = arith.constant 0 : index
    %c9_13 = arith.constant 9 : index
    %c0_14 = arith.constant 0 : index
    %16 = vector.load %arg9[%c0_12, %c9_13, %c0_14] : memref<10x10x4xf32, #tpu.memory_space<vmem>>, vector<10x1x4xf32>
    tpu.vector_store %arg9[%c0_12, %c9_13, %c0_14], %12 {strides = array<i32>} : memref<10x10x4xf32, #tpu.memory_space<vmem>>, vector<10x1x4xf32>,
    %cst_15 = arith.constant 0.000000e+00 : f32
    %17 = vector.broadcast %cst_15 : f32 to vector<1x10x8xf32>
    %cst_16 = arith.constant 0.000000e+00 : f32
    %18 = vector.broadcast %cst_16 : f32 to vector<10x1x8xf32>
    %c0_17 = arith.constant 0 : index
    %c0_18 = arith.constant 0 : index
    %c0_19 = arith.constant 0 : index
    %19 = vector.load %arg10[%c0_17, %c0_18, %c0_19] : memref<10x10x8xf32, #tpu.memory_space<vmem>>, vector<1x10x8xf32>
    tpu.vector_store %arg10[%c0_17, %c0_18, %c0_19], %17 {strides = array<i32>} : memref<10x10x8xf32, #tpu.memory_space<vmem>>, vector<1x10x8xf32>,
    %c9_20 = arith.constant 9 : index
    %c0_21 = arith.constant 0 : index
    %c0_22 = arith.constant 0 : index
    %20 = vector.load %arg10[%c9_20, %c0_21, %c0_22] : memref<10x10x8xf32, #tpu.memory_space<vmem>>, vector<1x10x8xf32>
    tpu.vector_store %arg10[%c9_20, %c0_21, %c0_22], %17 {strides = array<i32>} : memref<10x10x8xf32, #tpu.memory_space<vmem>>, vector<1x10x8xf32>,
    %c0_23 = arith.constant 0 : index
    %c0_24 = arith.constant 0 : index
    %c0_25 = arith.constant 0 : index
    %21 = vector.load %arg10[%c0_23, %c0_24, %c0_25] : memref<10x10x8xf32, #tpu.memory_space<vmem>>, vector<10x1x8xf32>
    tpu.vector_store %arg10[%c0_23, %c0_24, %c0_25], %18 {strides = array<i32>} : memref<10x10x8xf32, #tpu.memory_space<vmem>>, vector<10x1x8xf32>,
    %c0_26 = arith.constant 0 : index
    %c9_27 = arith.constant 9 : index
    %c0_28 = arith.constant 0 : index
    %22 = vector.load %arg10[%c0_26, %c9_27, %c0_28] : memref<10x10x8xf32, #tpu.memory_space<vmem>>, vector<10x1x8xf32>
    tpu.vector_store %arg10[%c0_26, %c9_27, %c0_28], %18 {strides = array<i32>} : memref<10x10x8xf32, #tpu.memory_space<vmem>>, vector<10x1x8xf32>,
    %c1 = arith.constant 1 : index
    %c1_29 = arith.constant 1 : index
    %c0_30 = arith.constant 0 : index
    %23 = vector.load %arg9[%c1, %c1_29, %c0_30] : memref<10x10x4xf32, #tpu.memory_space<vmem>>, vector<8x8x4xf32>
    tpu.vector_store %arg9[%c1, %c1_29, %c0_30], %10 {strides = array<i32>} : memref<10x10x4xf32, #tpu.memory_space<vmem>>, vector<8x8x4xf32>,
    %c0_31 = arith.constant 0 : index
    %c0_32 = arith.constant 0 : index
    %c0_33 = arith.constant 0 : index
    %24 = vector.load %arg9[%c0_31, %c0_32, %c0_33] : memref<10x10x4xf32, #tpu.memory_space<vmem>>, vector<8x8x4xf32>
    %25 = vector.shape_cast %24 : vector<8x8x4xf32> to vector<64x4xf32>
    %c0_34 = arith.constant 0 : index
    %c1_35 = arith.constant 1 : index
    %c0_36 = arith.constant 0 : index
    %26 = vector.load %arg9[%c0_34, %c1_35, %c0_36] : memref<10x10x4xf32, #tpu.memory_space<vmem>>, vector<8x8x4xf32>
    %27 = vector.shape_cast %26 : vector<8x8x4xf32> to vector<64x4xf32>
    %c0_37 = arith.constant 0 : index
    %c2 = arith.constant 2 : index
    %c0_38 = arith.constant 0 : index
    %28 = vector.load %arg9[%c0_37, %c2, %c0_38] : memref<10x10x4xf32, #tpu.memory_space<vmem>>, vector<8x8x4xf32>
    %29 = vector.shape_cast %28 : vector<8x8x4xf32> to vector<64x4xf32>
    %c1_39 = arith.constant 1 : index
    %c0_40 = arith.constant 0 : index
    %c0_41 = arith.constant 0 : index
    %30 = vector.load %arg9[%c1_39, %c0_40, %c0_41] : memref<10x10x4xf32, #tpu.memory_space<vmem>>, vector<8x8x4xf32>
    %31 = vector.shape_cast %30 : vector<8x8x4xf32> to vector<64x4xf32>
    %c1_42 = arith.constant 1 : index
    %c1_43 = arith.constant 1 : index
    %c0_44 = arith.constant 0 : index
    %32 = vector.load %arg9[%c1_42, %c1_43, %c0_44] : memref<10x10x4xf32, #tpu.memory_space<vmem>>, vector<8x8x4xf32>
    %33 = vector.shape_cast %32 : vector<8x8x4xf32> to vector<64x4xf32>
    %c1_45 = arith.constant 1 : index
    %c2_46 = arith.constant 2 : index
    %c0_47 = arith.constant 0 : index
    %34 = vector.load %arg9[%c1_45, %c2_46, %c0_47] : memref<10x10x4xf32, #tpu.memory_space<vmem>>, vector<8x8x4xf32>
    %35 = vector.shape_cast %34 : vector<8x8x4xf32> to vector<64x4xf32>
    %c2_48 = arith.constant 2 : index
    %c0_49 = arith.constant 0 : index
    %c0_50 = arith.constant 0 : index
    %36 = vector.load %arg9[%c2_48, %c0_49, %c0_50] : memref<10x10x4xf32, #tpu.memory_space<vmem>>, vector<8x8x4xf32>
    %37 = vector.shape_cast %36 : vector<8x8x4xf32> to vector<64x4xf32>
    %c2_51 = arith.constant 2 : index
    %c1_52 = arith.constant 1 : index
    %c0_53 = arith.constant 0 : index
    %38 = vector.load %arg9[%c2_51, %c1_52, %c0_53] : memref<10x10x4xf32, #tpu.memory_space<vmem>>, vector<8x8x4xf32>
    %39 = vector.shape_cast %38 : vector<8x8x4xf32> to vector<64x4xf32>
    %c2_54 = arith.constant 2 : index
    %c2_55 = arith.constant 2 : index
    %c0_56 = arith.constant 0 : index
    %40 = vector.load %arg9[%c2_54, %c2_55, %c0_56] : memref<10x10x4xf32, #tpu.memory_space<vmem>>, vector<8x8x4xf32>
    %41 = vector.shape_cast %40 : vector<8x8x4xf32> to vector<64x4xf32>
    %42 = tpu.concatenate %25, %27, %29, %31, %33, %35, %37, %39, %41 in 1 : vector<64x4xf32>, vector<64x4xf32>, vector<64x4xf32>, vector<64x4xf32>, vector<64x4xf32>, vector<64x4xf32>, vector<64x4xf32>, vector<64x4xf32>, vector<64x4xf32> -> vector<64x36xf32>
    %c0_57 = arith.constant 0 : index
    %c0_58 = arith.constant 0 : index
    %43 = vector.load %arg2[%c0_57, %c0_58] : memref<36x8xf32, #tpu.memory_space<vmem>>, vector<36x8xf32>
    %cst_59 = arith.constant dense<0.000000e+00> : vector<64x8xf32>
    %44 = tpu.matmul %42, %43, %cst_59 {dimension_numbers = #tpu.dot_dimension_numbers<[1], [0], [0], [1], [0, 0, 1, 1], [], []>} : vector<64x36xf32>, vector<36x8xf32>, vector<64x8xf32> -> vector<64x8xf32>
    %c0_60 = arith.constant 0 : index
    %c0_61 = arith.constant 0 : index
    %45 = vector.load %arg3[%c0_60, %c0_61] : memref<1x8xf32, #tpu.memory_space<vmem>>, vector<1x8xf32>
    %46 = vector.broadcast %45 : vector<1x8xf32> to vector<64x8xf32>
    %47 = arith.mulf %44, %46 : vector<64x8xf32>
    %c0_62 = arith.constant 0 : index
    %c0_63 = arith.constant 0 : index
    %48 = vector.load %arg4[%c0_62, %c0_63] : memref<1x8xf32, #tpu.memory_space<vmem>>, vector<1x8xf32>
    %49 = vector.broadcast %48 : vector<1x8xf32> to vector<64x8xf32>
    %50 = arith.addf %47, %49 : vector<64x8xf32>
    %cst_64 = arith.constant 0.000000e+00 : f32
    %51 = vector.broadcast %cst_64 : f32 to vector<64x8xf32>
    %52 = arith.maximumf %50, %51 : vector<64x8xf32>
    %53 = vector.shape_cast %52 : vector<64x8xf32> to vector<8x8x8xf32>
    %c1_65 = arith.constant 1 : index
    %c1_66 = arith.constant 1 : index
    %c0_67 = arith.constant 0 : index
    %54 = vector.load %arg10[%c1_65, %c1_66, %c0_67] : memref<10x10x8xf32, #tpu.memory_space<vmem>>, vector<8x8x8xf32>
    tpu.vector_store %arg10[%c1_65, %c1_66, %c0_67], %53 {strides = array<i32>} : memref<10x10x8xf32, #tpu.memory_space<vmem>>, vector<8x8x8xf32>,
    %c0_68 = arith.constant 0 : index
    %c0_69 = arith.constant 0 : index
    %c0_70 = arith.constant 0 : index
    %55 = vector.load %arg10[%c0_68, %c0_69, %c0_70] : memref<10x10x8xf32, #tpu.memory_space<vmem>>, vector<8x8x8xf32>
    %56 = vector.shape_cast %55 : vector<8x8x8xf32> to vector<64x8xf32>
    %c0_71 = arith.constant 0 : index
    %c1_72 = arith.constant 1 : index
    %c0_73 = arith.constant 0 : index
    %57 = vector.load %arg10[%c0_71, %c1_72, %c0_73] : memref<10x10x8xf32, #tpu.memory_space<vmem>>, vector<8x8x8xf32>
    %58 = vector.shape_cast %57 : vector<8x8x8xf32> to vector<64x8xf32>
    %c0_74 = arith.constant 0 : index
    %c2_75 = arith.constant 2 : index
    %c0_76 = arith.constant 0 : index
    %59 = vector.load %arg10[%c0_74, %c2_75, %c0_76] : memref<10x10x8xf32, #tpu.memory_space<vmem>>, vector<8x8x8xf32>
    %60 = vector.shape_cast %59 : vector<8x8x8xf32> to vector<64x8xf32>
    %c1_77 = arith.constant 1 : index
    %c0_78 = arith.constant 0 : index
    %c0_79 = arith.constant 0 : index
    %61 = vector.load %arg10[%c1_77, %c0_78, %c0_79] : memref<10x10x8xf32, #tpu.memory_space<vmem>>, vector<8x8x8xf32>
    %62 = vector.shape_cast %61 : vector<8x8x8xf32> to vector<64x8xf32>
    %c1_80 = arith.constant 1 : index
    %c1_81 = arith.constant 1 : index
    %c0_82 = arith.constant 0 : index
    %63 = vector.load %arg10[%c1_80, %c1_81, %c0_82] : memref<10x10x8xf32, #tpu.memory_space<vmem>>, vector<8x8x8xf32>
    %64 = vector.shape_cast %63 : vector<8x8x8xf32> to vector<64x8xf32>
    %c1_83 = arith.constant 1 : index
    %c2_84 = arith.constant 2 : index
    %c0_85 = arith.constant 0 : index
    %65 = vector.load %arg10[%c1_83, %c2_84, %c0_85] : memref<10x10x8xf32, #tpu.memory_space<vmem>>, vector<8x8x8xf32>
    %66 = vector.shape_cast %65 : vector<8x8x8xf32> to vector<64x8xf32>
    %c2_86 = arith.constant 2 : index
    %c0_87 = arith.constant 0 : index
    %c0_88 = arith.constant 0 : index
    %67 = vector.load %arg10[%c2_86, %c0_87, %c0_88] : memref<10x10x8xf32, #tpu.memory_space<vmem>>, vector<8x8x8xf32>
    %68 = vector.shape_cast %67 : vector<8x8x8xf32> to vector<64x8xf32>
    %c2_89 = arith.constant 2 : index
    %c1_90 = arith.constant 1 : index
    %c0_91 = arith.constant 0 : index
    %69 = vector.load %arg10[%c2_89, %c1_90, %c0_91] : memref<10x10x8xf32, #tpu.memory_space<vmem>>, vector<8x8x8xf32>
    %70 = vector.shape_cast %69 : vector<8x8x8xf32> to vector<64x8xf32>
    %c2_92 = arith.constant 2 : index
    %c2_93 = arith.constant 2 : index
    %c0_94 = arith.constant 0 : index
    %71 = vector.load %arg10[%c2_92, %c2_93, %c0_94] : memref<10x10x8xf32, #tpu.memory_space<vmem>>, vector<8x8x8xf32>
    %72 = vector.shape_cast %71 : vector<8x8x8xf32> to vector<64x8xf32>
    %73 = tpu.concatenate %56, %58, %60, %62, %64, %66, %68, %70, %72 in 1 : vector<64x8xf32>, vector<64x8xf32>, vector<64x8xf32>, vector<64x8xf32>, vector<64x8xf32>, vector<64x8xf32>, vector<64x8xf32>, vector<64x8xf32>, vector<64x8xf32> -> vector<64x72xf32>
    %c0_95 = arith.constant 0 : index
    %c0_96 = arith.constant 0 : index
    %74 = vector.load %arg5[%c0_95, %c0_96] : memref<72x8xf32, #tpu.memory_space<vmem>>, vector<72x8xf32>
    %cst_97 = arith.constant dense<0.000000e+00> : vector<64x8xf32>
    %75 = tpu.matmul %73, %74, %cst_97 {dimension_numbers = #tpu.dot_dimension_numbers<[1], [0], [0], [1], [0, 0, 1, 1], [], []>} : vector<64x72xf32>, vector<72x8xf32>, vector<64x8xf32> -> vector<64x8xf32>
    %c0_98 = arith.constant 0 : index
    %c0_99 = arith.constant 0 : index
    %76 = vector.load %arg6[%c0_98, %c0_99] : memref<1x8xf32, #tpu.memory_space<vmem>>, vector<1x8xf32>
    %77 = vector.broadcast %76 : vector<1x8xf32> to vector<64x8xf32>
    %78 = arith.mulf %75, %77 : vector<64x8xf32>
    %c0_100 = arith.constant 0 : index
    %c0_101 = arith.constant 0 : index
    %79 = vector.load %arg7[%c0_100, %c0_101] : memref<1x8xf32, #tpu.memory_space<vmem>>, vector<1x8xf32>
    %80 = vector.broadcast %79 : vector<1x8xf32> to vector<64x8xf32>
    %81 = arith.addf %78, %80 : vector<64x8xf32>
    %cst_102 = arith.constant 0.000000e+00 : f32
    %82 = vector.broadcast %cst_102 : f32 to vector<64x8xf32>
    %83 = arith.maximumf %81, %82 : vector<64x8xf32>
    %84 = vector.shape_cast %83 : vector<64x8xf32> to vector<8x8x8xf32>
    %c0_103 = arith.constant 0 : index
    %c0_104 = arith.constant 0 : index
    %c0_105 = arith.constant 0 : index
    %c0_106 = arith.constant 0 : index
    %85 = vector.load %arg8[%c0_103, %c0_104, %c0_105, %c0_106] : memref<1x8x8x8xf32, #tpu.memory_space<vmem>>, vector<1x8x8x8xf32>
    %86 = vector.shape_cast %85 : vector<1x8x8x8xf32> to vector<8x8x8xf32>
    %87 = vector.shape_cast %84 : vector<8x8x8xf32> to vector<1x8x8x8xf32>
    tpu.vector_store %arg8[%c0_103, %c0_104, %c0_105, %c0_106], %87 {strides = array<i32>} : memref<1x8x8x8xf32, #tpu.memory_space<vmem>>, vector<1x8x8x8xf32>,
    return
  }
  func.func @transform_0(%arg0: i32) -> (i32, i32, i32, i32) {
    %c0_i32 = arith.constant 0 : i32
    %c0_i32_0 = arith.constant 0 : i32
    %c0_i32_1 = arith.constant 0 : i32
    %c0_i32_2 = arith.constant 0 : i32
    return %arg0, %c0_i32, %c0_i32_0, %c0_i32_1 : i32, i32, i32, i32
  }
  func.func @transform_1(%arg0: i32) -> (i32, i32) {
    %c0_i32 = arith.constant 0 : i32
    %c0_i32_0 = arith.constant 0 : i32
    %c0_i32_1 = arith.constant 0 : i32
    return %c0_i32, %c0_i32_0 : i32, i32
  }
  func.func @transform_2(%arg0: i32) -> (i32, i32) {
    %c0_i32 = arith.constant 0 : i32
    %c0_i32_0 = arith.constant 0 : i32
    %c0_i32_1 = arith.constant 0 : i32
    return %c0_i32, %c0_i32_0 : i32, i32
  }
  func.func @transform_3(%arg0: i32) -> (i32, i32) {
    %c0_i32 = arith.constant 0 : i32
    %c0_i32_0 = arith.constant 0 : i32
    %c0_i32_1 = arith.constant 0 : i32
    return %c0_i32, %c0_i32_0 : i32, i32
  }
  func.func @transform_4(%arg0: i32) -> (i32, i32) {
    %c0_i32 = arith.constant 0 : i32
    %c0_i32_0 = arith.constant 0 : i32
    %c0_i32_1 = arith.constant 0 : i32
    return %c0_i32, %c0_i32_0 : i32, i32
  }
  func.func @transform_5(%arg0: i32) -> (i32, i32) {
    %c0_i32 = arith.constant 0 : i32
    %c0_i32_0 = arith.constant 0 : i32
    %c0_i32_1 = arith.constant 0 : i32
    return %c0_i32, %c0_i32_0 : i32, i32
  }
  func.func @transform_6(%arg0: i32) -> (i32, i32) {
    %c0_i32 = arith.constant 0 : i32
    %c0_i32_0 = arith.constant 0 : i32
    %c0_i32_1 = arith.constant 0 : i32
    return %c0_i32, %c0_i32_0 : i32, i32
  }
  func.func @transform_7(%arg0: i32) -> (i32, i32, i32, i32) {
    %c0_i32 = arith.constant 0 : i32
    %c0_i32_0 = arith.constant 0 : i32
    %c0_i32_1 = arith.constant 0 : i32
    %c0_i32_2 = arith.constant 0 : i32
    return %arg0, %c0_i32, %c0_i32_0, %c0_i32_1 : i32, i32, i32, i32
  }
}

</mosaic_0001>

<llo_original>
// kernel: tpu_custom_call.1
$region0: #{tpu_custom_call.1}
  #allocation0 [shape = 'u32[]', space=smem, size = 0x4, offset = 0x4, fixed_abs, tag = 'smem constant byte address 0x4 - core index']
  #allocation1 [shape = 'u32[72,128]{1,0:T(1,128)}', space=vmem, size = 0x9000, scoped, tag = 'internal scratch']
  #allocation2 [shape = 'f32[10,10,4]{2,1,0:T(8,128)}', space=vmem, size = 0x14000, scoped, tag = 'scratch operand']
  #allocation3 [shape = 'f32[10,10,8]{2,1,0:T(8,128)}', space=vmem, size = 0x14000, scoped, tag = 'scratch operand']
  %s0 = inlined_call_operand.vmem [shape: f32[2,16,8,8], index: 0, kind: input, shape index: {}]
  %s1 = inlined_call_operand.vmem [shape: f32[36,8], index: 1, kind: input, shape index: {}]
  %s2 = inlined_call_operand.vmem [shape: f32[1,8], index: 2, kind: input, shape index: {}]
  %s3 = inlined_call_operand.vmem [shape: f32[1,8], index: 3, kind: input, shape index: {}]
  %s4 = inlined_call_operand.vmem [shape: f32[72,8], index: 4, kind: input, shape index: {}]
  %s5 = inlined_call_operand.vmem [shape: f32[1,8], index: 5, kind: input, shape index: {}]
  %s6 = inlined_call_operand.vmem [shape: f32[1,8], index: 6, kind: input, shape index: {}]
  %s7 = inlined_call_operand.hbm [shape: f32[2,8,8,8], index: 7, kind: output, shape index: {}]
  %s8 = sld [smem:[#allocation0]]
  $region61: #{tpu_custom_call.1} parent=0
    _
  %s10 = ssub.s32 1, %s8
  %s11 = scalar_select 0, %s10, %s8
  $region1: #{tpu_custom_call.1} parent=0
    #allocation4 [shape = 'u8[65536]{0}', space=vmem, size = 0x10000, scoped, tag = 'output window, operand 0']
    #allocation5 [shape = 's32[2]{0}', space=sflag, size = 0x8, scoped, tag = 'scoped memory for tpu_custom_call.1']
    %12 = vsyncpa [#allocation5], 0
    %s13 = scalar_lea.sflag [#allocation5], 1
    %14 = vsyncpa %s13, 0
    loop: start=0, step=1, limit=4
    $region2: #{tpu_custom_call.1} parent=1 // loop_pre_header
      _
    $region3: #{tpu_custom_call.1} parent=1 // loop_header
      %s16 = sphi 0, %s20
      %p17 = scmp.ge.s32.totalorder %s16, 4
      %s26 = sphi 0, %s28
      %s29 = sphi 0, %s26
      %s30 = sphi 0, %s29
      %s46 = sphi 0, %s30
      %s50 = sphi 0, %s50
      %s52 = sphi 0, %s50
      %s53 = sphi 0, %s52
      %s67 = sphi 0, %s53
      %s71 = sphi 0, %s71
      %s73 = sphi 0, %s71
      %s74 = sphi 0, %s73
      %s88 = sphi 0, %s74
      %s92 = sphi 0, %s92
      %s94 = sphi 0, %s92
      %s95 = sphi 0, %s94
      %s109 = sphi 0, %s95
      %s113 = sphi 0, %s113
      %s115 = sphi 0, %s113
      %s116 = sphi 0, %s115
      %s130 = sphi 0, %s116
      %s134 = sphi 0, %s134
      %s136 = sphi 0, %s134
      %s137 = sphi 0, %s136
      %s151 = sphi 0, %s137
      %s155 = sphi 0, %s155
      %s157 = sphi 0, %s155
      %s158 = sphi 0, %s157
      %s172 = sphi 0, %s158
      %s178 = sphi 0, %s180
      %s181 = sphi 0, %s178
      %s182 = sphi 0, %s181
      %s198 = sphi 0, %s182
    $region4: #{tpu_custom_call.1} parent=1 // loop_header_branch
      %19 = sbr.rel (%p17) target = $region8
    $region5: #{tpu_custom_call.1} parent=1 // loop_body
      %s21 = ssub.s32 %s16, 1
      %s22 = ssub.s32 %s16, 2
      %s23 = sadd.s32 %s16, 1
      %s24 = ssub.s32 %s16, %s23
      %p25 = scmp.eq.s32.totalorder %s24, 0
      %s27 = sadd.s32 %s26, 1
      %s28 = scalar_select %p25, %s26, %s27
      %p31 = pneg %p25
      %p32 = scmp.eq.s32.totalorder %s16, 1
      %p33 = por %p31, %p32
      %p34 = scmp.ne.s32.totalorder %s26, %s29
      %p35 = scmp.eq.s32.totalorder %s16, 0
      %p36 = por %p34, %p35
      %p37 = scmp.ne.s32.totalorder %s26, %s29
      %p38 = scmp.eq.s32.totalorder %s21, 1
      %p39 = por %p37, %p38
      %p40 = scmp.ne.s32.totalorder %s29, %s30
      %p41 = scmp.eq.s32.totalorder %s21, 0
      %p42 = por %p40, %p41
      %p43 = scmp.ne.s32.totalorder %s29, %s30
      %p44 = scmp.eq.s32.totalorder %s22, 1
      %p45 = por %p43, %p44
      %p47 = scmp.ne.s32.totalorder %s30, %s46
      %p48 = scmp.eq.s32.totalorder %s22, 0
      %p49 = por %p47, %p48
      %s51 = sadd.s32 %s50, 1
      %p54 = scmp.eq.s32.totalorder %s16, 1
      %p55 = scmp.ne.s32.totalorder %s50, %s52
      %p56 = scmp.eq.s32.totalorder %s16, 0
      %p57 = por %p55, %p56
      %p58 = scmp.ne.s32.totalorder %s50, %s52
      %p59 = scmp.eq.s32.totalorder %s21, 1
      %p60 = por %p58, %p59
      %p61 = scmp.ne.s32.totalorder %s52, %s53
      %p62 = scmp.eq.s32.totalorder %s21, 0
      %p63 = por %p61, %p62
      %p64 = scmp.ne.s32.totalorder %s52, %s53
      %p65 = scmp.eq.s32.totalorder %s22, 1
      %p66 = por %p64, %p65
      %p68 = scmp.ne.s32.totalorder %s53, %s67
      %p69 = scmp.eq.s32.totalorder %s22, 0
      %p70 = por %p68, %p69
      %s72 = sadd.s32 %s71, 1
      %p75 = scmp.eq.s32.totalorder %s16, 1
      %p76 = scmp.ne.s32.totalorder %s71, %s73
      %p77 = scmp.eq.s32.totalorder %s16, 0
      %p78 = por %p76, %p77
      %p79 = scmp.ne.s32.totalorder %s71, %s73
      %p80 = scmp.eq.s32.totalorder %s21, 1
      %p81 = por %p79, %p80
      %p82 = scmp.ne.s32.totalorder %s73, %s74
      %p83 = scmp.eq.s32.totalorder %s21, 0
      %p84 = por %p82, %p83
      %p85 = scmp.ne.s32.totalorder %s73, %s74
      %p86 = scmp.eq.s32.totalorder %s22, 1
      %p87 = por %p85, %p86
      %p89 = scmp.ne.s32.totalorder %s74, %s88
      %p90 = scmp.eq.s32.totalorder %s22, 0
      %p91 = por %p89, %p90
      %s93 = sadd.s32 %s92, 1
      %p96 = scmp.eq.s32.totalorder %s16, 1
      %p97 = scmp.ne.s32.totalorder %s92, %s94
      %p98 = scmp.eq.s32.totalorder %s16, 0
      %p99 = por %p97, %p98
      %p100 = scmp.ne.s32.totalorder %s92, %s94
      %p101 = scmp.eq.s32.totalorder %s21, 1
      %p102 = por %p100, %p101
      %p103 = scmp.ne.s32.totalorder %s94, %s95
      %p104 = scmp.eq.s32.totalorder %s21, 0
      %p105 = por %p103, %p104
      %p106 = scmp.ne.s32.totalorder %s94, %s95
      %p107 = scmp.eq.s32.totalorder %s22, 1
      %p108 = por %p106, %p107
      %p110 = scmp.ne.s32.totalorder %s95, %s109
      %p111 = scmp.eq.s32.totalorder %s22, 0
      %p112 = por %p110, %p111
      %s114 = sadd.s32 %s113, 1
      %p117 = scmp.eq.s32.totalorder %s16, 1
      %p118 = scmp.ne.s32.totalorder %s113, %s115
      %p119 = scmp.eq.s32.totalorder %s16, 0
      %p120 = por %p118, %p119
      %p121 = scmp.ne.s32.totalorder %s113, %s115
      %p122 = scmp.eq.s32.totalorder %s21, 1
      %p123 = por %p121, %p122
      %p124 = scmp.ne.s32.totalorder %s115, %s116
      %p125 = scmp.eq.s32.totalorder %s21, 0
      %p126 = por %p124, %p125
      %p127 = scmp.ne.s32.totalorder %s115, %s116
      %p128 = scmp.eq.s32.totalorder %s22, 1
      %p129 = por %p127, %p128
      %p131 = scmp.ne.s32.totalorder %s116, %s130
      %p132 = scmp.eq.s32.totalorder %s22, 0
      %p133 = por %p131, %p132
      %s135 = sadd.s32 %s134, 1
      %p138 = scmp.eq.s32.totalorder %s16, 1
      %p139 = scmp.ne.s32.totalorder %s134, %s136
      %p140 = scmp.eq.s32.totalorder %s16, 0
      %p141 = por %p139, %p140
      %p142 = scmp.ne.s32.totalorder %s134, %s136
      %p143 = scmp.eq.s32.totalorder %s21, 1
      %p144 = por %p142, %p143
      %p145 = scmp.ne.s32.totalorder %s136, %s137
      %p146 = scmp.eq.s32.totalorder %s21, 0
      %p147 = por %p145, %p146
      %p148 = scmp.ne.s32.totalorder %s136, %s137
      %p149 = scmp.eq.s32.totalorder %s22, 1
      %p150 = por %p148, %p149
      %p152 = scmp.ne.s32.totalorder %s137, %s151
      %p153 = scmp.eq.s32.totalorder %s22, 0
      %p154 = por %p152, %p153
      %s156 = sadd.s32 %s155, 1
      %p159 = scmp.eq.s32.totalorder %s16, 1
      %p160 = scmp.ne.s32.totalorder %s155, %s157
      %p161 = scmp.eq.s32.totalorder %s16, 0
      %p162 = por %p160, %p161
      %p163 = scmp.ne.s32.totalorder %s155, %s157
      %p164 = scmp.eq.s32.totalorder %s21, 1
      %p165 = por %p163, %p164
      %p166 = scmp.ne.s32.totalorder %s157, %s158
      %p167 = scmp.eq.s32.totalorder %s21, 0
      %p168 = por %p166, %p167
      %p169 = scmp.ne.s32.totalorder %s157, %s158
      %p170 = scmp.eq.s32.totalorder %s22, 1
      %p171 = por %p169, %p170
      %p173 = scmp.ne.s32.totalorder %s158, %s172
      %p174 = scmp.eq.s32.totalorder %s22, 0
      %p175 = por %p173, %p174
      %s176 = ssub.s32 %s16, %s23
      %p177 = scmp.eq.s32.totalorder %s176, 0
      %s179 = sadd.s32 %s178, 1
      %s180 = scalar_select %p177, %s178, %s179
      %p183 = pneg %p177
      %p184 = scmp.eq.s32.totalorder %s16, 1
      %p185 = por %p183, %p184
      %p186 = scmp.ne.s32.totalorder %s178, %s181
      %p187 = scmp.eq.s32.totalorder %s16, 0
      %p188 = por %p186, %p187
      %p189 = scmp.ne.s32.totalorder %s178, %s181
      %p190 = scmp.eq.s32.totalorder %s21, 1
      %p191 = por %p189, %p190
      %p192 = scmp.ne.s32.totalorder %s181, %s182
      %p193 = scmp.eq.s32.totalorder %s21, 0
      %p194 = por %p192, %p193
      %p195 = scmp.ne.s32.totalorder %s181, %s182
      %p196 = scmp.eq.s32.totalorder %s22, 1
      %p197 = por %p195, %p196
      %p199 = scmp.ne.s32.totalorder %s182, %s198
      %p200 = scmp.eq.s32.totalorder %s22, 0
      %p201 = por %p199, %p200
      %p202 = scmp.le.s32.totalorder 1, %s16
      %p203 = scmp.lt.s32.totalorder %s16, 3
      %p204 = pnand %p202, %p203
      %p205 = pneg %p204
      // Predicated region
      $region9: #{tpu_custom_call.1} parent=5 // pred_check
        _
      $region10: #{tpu_custom_call.1} parent=5 // pred_check_branch
        %207 = sbr.rel (%p204) target = $region12
      $region11: #{tpu_custom_call.1} parent=5 // pred_region
        %s208 = ssub.s32 %s16, 1
        // Predicated region
        $region13: #{tpu_custom_call.1} parent=11 // pred_check
          %p209 = pneg %p63
        $region14: #{tpu_custom_call.1} parent=11 // pred_check_branch
          %211 = sbr.rel (%p209) target = $region16
        $region15: #{tpu_custom_call.1} parent=11 // pred_region
          _
        $region16: #{tpu_custom_call.1} parent=11 // pred_fallthru
          _
        // Predicated region
        $region17: #{tpu_custom_call.1} parent=11 // pred_check
          %p212 = pneg %p84
        $region18: #{tpu_custom_call.1} parent=11 // pred_check_branch
          %214 = sbr.rel (%p212) target = $region20
        $region19: #{tpu_custom_call.1} parent=11 // pred_region
          _
        $region20: #{tpu_custom_call.1} parent=11 // pred_fallthru
          _
        // Predicated region
        $region21: #{tpu_custom_call.1} parent=11 // pred_check
          %p215 = pneg %p105
        $region22: #{tpu_custom_call.1} parent=11 // pred_check_branch
          %217 = sbr.rel (%p215) target = $region24
        $region23: #{tpu_custom_call.1} parent=11 // pred_region
          _
        $region24: #{tpu_custom_call.1} parent=11 // pred_fallthru
          _
        // Predicated region
        $region25: #{tpu_custom_call.1} parent=11 // pred_check
          %p218 = pneg %p126
        $region26: #{tpu_custom_call.1} parent=11 // pred_check_branch
          %220 = sbr.rel (%p218) target = $region28
        $region27: #{tpu_custom_call.1} parent=11 // pred_region
          _
        $region28: #{tpu_custom_call.1} parent=11 // pred_fallthru
          _
        // Predicated region
        $region29: #{tpu_custom_call.1} parent=11 // pred_check
          %p221 = pneg %p147
        $region30: #{tpu_custom_call.1} parent=11 // pred_check_branch
          %223 = sbr.rel (%p221) target = $region32
        $region31: #{tpu_custom_call.1} parent=11 // pred_region
          _
        $region32: #{tpu_custom_call.1} parent=11 // pred_fallthru
          _
        // Predicated region
        $region33: #{tpu_custom_call.1} parent=11 // pred_check
          %p224 = pneg %p168
        $region34: #{tpu_custom_call.1} parent=11 // pred_check_branch
          %226 = sbr.rel (%p224) target = $region36
        $region35: #{tpu_custom_call.1} parent=11 // pred_region
          _
        $region36: #{tpu_custom_call.1} parent=11 // pred_fallthru
          _
      $region12: #{tpu_custom_call.1} parent=5 // pred_fallthru
        _
      %p227 = scmp.lt.s32.totalorder %s16, 2
      // Predicated region
      $region37: #{tpu_custom_call.1} parent=5 // pred_check
        %p228 = pneg %p227
      $region38: #{tpu_custom_call.1} parent=5 // pred_check_branch
        %230 = sbr.rel (%p228) target = $region40
      $region39: #{tpu_custom_call.1} parent=5 // pred_region
        // Predicated region
        $region41: #{tpu_custom_call.1} parent=39 // pred_check
          %p231 = pneg %p36
        $region42: #{tpu_custom_call.1} parent=39 // pred_check_branch
          %233 = sbr.rel (%p231) target = $region44
        $region43: #{tpu_custom_call.1} parent=39 // pred_region
          %p234 = scmp.lt.s32.totalorder %s16, 1
          %s235 = scalar_select %p234, %s16, 1
          %s236 = smul.addr %s235, 16
          %s237 = smul.addr %s236, 8
          %s238 = scalar_lea.vmem %s0, %s237
        $region44: #{tpu_custom_call.1} parent=39 // pred_fallthru
          _
      $region40: #{tpu_custom_call.1} parent=5 // pred_fallthru
        _
      %p239 = scmp.le.s32.totalorder 1, %s16
      %p240 = scmp.lt.s32.totalorder %s16, 3
      %p241 = pnand %p239, %p240
      %p242 = pneg %p241
      // Predicated region
      $region45: #{tpu_custom_call.1} parent=5 // pred_check
        _
      $region46: #{tpu_custom_call.1} parent=5 // pred_check_branch
        %244 = sbr.rel (%p241) target = $region48
      $region47: #{tpu_custom_call.1} parent=5 // pred_region
        %s245 = ssub.s32 %s16, 1
        %p246 = scmp.lt.s32.totalorder %s21, 1
        %s247 = scalar_select %p246, %s21, 1
        %s248 = smul.addr %s247, 16
        %s249 = smul.addr %s248, 8
        %s250 = scalar_lea.vmem %s0, %s249
        %p251 = pneg %p42
        %p252 = pneg %p39
        %p253 = pneg %p63
        %p254 = pneg %p60
        %p255 = pneg %p84
        %p256 = pneg %p81
        %p257 = pneg %p105
        %p258 = pneg %p102
        %p259 = pneg %p126
        %p260 = pneg %p123
        %p261 = pneg %p147
        %p262 = pneg %p144
        %p263 = pneg %p168
        %p264 = pneg %p165
        %p265 = pneg %p194
        %p266 = pneg %p191
        %s267 = sand.u32 %s181, 1
        %s268 = scalar_lea.sflag [#allocation5], %s267
        %s269 = sand.u32 %s181, 1
        %s270 = smul.addr %s269, 64
        %s271 = scalar_lea.vmem [#allocation4], %s270
        %p272 = scmp.lt.s32.totalorder %s21, 1
        %s273 = scalar_select %p272, %s21, 1
        %s274 = smul.addr %s273, 16
        %s275 = smul.addr %s274, 8
        %s276 = scalar_lea.vmem %s0, %s275
        %v277 = vld [vmem:[%s276] sm:$0xff]
        %v278 = vld [vmem:[%s276 + $0x8] sm:$0xff]
        %v279 = vld [vmem:[%s276 + $0x10] sm:$0xff]
        %v280 = vld [vmem:[%s276 + $0x18] sm:$0xff]
        %v281 = vld [vmem:[%s276 + $0x20] sm:$0xff]
        %v282 = vld [vmem:[%s276 + $0x28] sm:$0xff]
        %v283 = vld [vmem:[%s276 + $0x30] sm:$0xff]
        %v284 = vld [vmem:[%s276 + $0x38] sm:$0xff]
        %v285 = vld [vmem:[%s276 + $0x40] sm:$0xff]
        %v286 = vld [vmem:[%s276 + $0x48] sm:$0xff]
        %v287 = vld [vmem:[%s276 + $0x50] sm:$0xff]
        %v288 = vld [vmem:[%s276 + $0x58] sm:$0xff]
        %v289 = vld [vmem:[%s276 + $0x60] sm:$0xff]
        %v290 = vld [vmem:[%s276 + $0x68] sm:$0xff]
        %v291 = vld [vmem:[%s276 + $0x70] sm:$0xff]
        %v292 = vld [vmem:[%s276 + $0x78] sm:$0xff]
        %309 = vrot.lane.b32.xlu0 %v277, 124
        %v310 = vpop.permute.xlu0 %309
        %311 = vrot.lane.b32.xlu0 %v278, 124
        %v312 = vpop.permute.xlu0 %311
        %313 = vrot.lane.b32.xlu0 %v279, 124
        %v314 = vpop.permute.xlu0 %313
        %315 = vrot.lane.b32.xlu0 %v280, 124
        %v316 = vpop.permute.xlu0 %315
        %317 = vrot.lane.b32.xlu0 %v281, 124
        %v318 = vpop.permute.xlu0 %317
        %319 = vrot.lane.b32.xlu0 %v282, 124
        %v320 = vpop.permute.xlu0 %319
        %321 = vrot.lane.b32.xlu0 %v283, 124
        %v322 = vpop.permute.xlu0 %321
        %323 = vrot.lane.b32.xlu0 %v284, 124
        %v324 = vpop.permute.xlu0 %323
        %325 = vrot.lane.b32.xlu0 %v285, 124
        %v326 = vpop.permute.xlu0 %325
        %327 = vrot.lane.b32.xlu0 %v286, 124
        %v328 = vpop.permute.xlu0 %327
        %329 = vrot.lane.b32.xlu0 %v287, 124
        %v330 = vpop.permute.xlu0 %329
        %331 = vrot.lane.b32.xlu0 %v288, 124
        %v332 = vpop.permute.xlu0 %331
        %333 = vrot.lane.b32.xlu0 %v289, 124
        %v334 = vpop.permute.xlu0 %333
        %335 = vrot.lane.b32.xlu0 %v290, 124
        %v336 = vpop.permute.xlu0 %335
        %337 = vrot.lane.b32.xlu0 %v291, 124
        %v338 = vpop.permute.xlu0 %337
        %339 = vrot.lane.b32.xlu0 %v292, 124
        %v340 = vpop.permute.xlu0 %339
        %v357 = vmax.f32 %v277, %v310
        %v358 = vmax.f32 %v278, %v312
        %v359 = vmax.f32 %v279, %v314
        %v360 = vmax.f32 %v280, %v316
        %v361 = vmax.f32 %v281, %v318
        %v362 = vmax.f32 %v282, %v320
        %v363 = vmax.f32 %v283, %v322
        %v364 = vmax.f32 %v284, %v324
        %v365 = vmax.f32 %v285, %v326
        %v366 = vmax.f32 %v286, %v328
        %v367 = vmax.f32 %v287, %v330
        %v368 = vmax.f32 %v288, %v332
        %v369 = vmax.f32 %v289, %v334
        %v370 = vmax.f32 %v290, %v336
        %v371 = vmax.f32 %v291, %v338
        %v372 = vmax.f32 %v292, %v340
        %v373 = vmax.f32 %v357, %v358
        %v374 = vmax.f32 %v359, %v360
        %v375 = vmax.f32 %v361, %v362
        %v376 = vmax.f32 %v363, %v364
        %v377 = vmax.f32 %v365, %v366
        %v378 = vmax.f32 %v367, %v368
        %v379 = vmax.f32 %v369, %v370
        %v380 = vmax.f32 %v371, %v372
        %vm381 = vcmask 31744
        %382 = vst.msk [vmem:[#allocation2] sm:$0xff] %vm381, 0.0
        %vm383 = vcmask 25600
        %384 = vst.msk [vmem:[#allocation2 + $0x8] sm:$0x3] %vm383, 0.0
        %s385 = scalar_lea.vmem [#allocation2], 144
        %386 = vst.msk [vmem:[%s385] sm:$0xff] %vm381, 0.0
        %387 = vst.msk [vmem:[%s385 + $0x8] sm:$0x3] %vm383, 0.0
        %vm388 = vcmask 24576
        %389 = vst.msk [vmem:[#allocation2] sm:$0x1] %vm388, 0.0
        %390 = vst.msk [vmem:[#allocation2 + $0x10] sm:$0x1] %vm388, 0.0
        %391 = vst.msk [vmem:[#allocation2 + $0x20] sm:$0x1] %vm388, 0.0
        %392 = vst.msk [vmem:[#allocation2 + $0x30] sm:$0x1] %vm388, 0.0
        %393 = vst.msk [vmem:[#allocation2 + $0x40] sm:$0x1] %vm388, 0.0
        %394 = vst.msk [vmem:[#allocation2 + $0x50] sm:$0x1] %vm388, 0.0
        %395 = vst.msk [vmem:[#allocation2 + $0x60] sm:$0x1] %vm388, 0.0
        %396 = vst.msk [vmem:[#allocation2 + $0x70] sm:$0x1] %vm388, 0.0
        %397 = vst.msk [vmem:[#allocation2 + $0x80] sm:$0x1] %vm388, 0.0
        %398 = vst.msk [vmem:[#allocation2 + $0x90] sm:$0x1] %vm388, 0.0
        %399 = vst.msk [vmem:[#allocation2 + $0x9] sm:$0x1] %vm388, 0.0
        %400 = vst.msk [vmem:[#allocation2 + $0x19] sm:$0x1] %vm388, 0.0
        %401 = vst.msk [vmem:[#allocation2 + $0x29] sm:$0x1] %vm388, 0.0
        %402 = vst.msk [vmem:[#allocation2 + $0x39] sm:$0x1] %vm388, 0.0
        %403 = vst.msk [vmem:[#allocation2 + $0x49] sm:$0x1] %vm388, 0.0
        %404 = vst.msk [vmem:[#allocation2 + $0x59] sm:$0x1] %vm388, 0.0
        %405 = vst.msk [vmem:[#allocation2 + $0x69] sm:$0x1] %vm388, 0.0
        %406 = vst.msk [vmem:[#allocation2 + $0x79] sm:$0x1] %vm388, 0.0
        %407 = vst.msk [vmem:[#allocation2 + $0x89] sm:$0x1] %vm388, 0.0
        %408 = vst.msk [vmem:[#allocation2 + $0x99] sm:$0x1] %vm388, 0.0
        %vm409 = vcmask 64512
        %410 = vst.msk [vmem:[#allocation3] sm:$0xff] %vm409, 0.0
        %vm411 = vcmask 58368
        %412 = vst.msk [vmem:[#allocation3 + $0x8] sm:$0x3] %vm411, 0.0
        %s413 = scalar_lea.vmem [#allocation3], 144
        %414 = vst.msk [vmem:[%s413] sm:$0xff] %vm409, 0.0
        %415 = vst.msk [vmem:[%s413 + $0x8] sm:$0x3] %vm411, 0.0
        %vm416 = vcmask 57344
        %417 = vst.msk [vmem:[#allocation3] sm:$0x1] %vm416, 0.0
        %418 = vst.msk [vmem:[#allocation3 + $0x10] sm:$0x1] %vm416, 0.0
        %419 = vst.msk [vmem:[#allocation3 + $0x20] sm:$0x1] %vm416, 0.0
        %420 = vst.msk [vmem:[#allocation3 + $0x30] sm:$0x1] %vm416, 0.0
        %421 = vst.msk [vmem:[#allocation3 + $0x40] sm:$0x1] %vm416, 0.0
        %422 = vst.msk [vmem:[#allocation3 + $0x50] sm:$0x1] %vm416, 0.0
        %423 = vst.msk [vmem:[#allocation3 + $0x60] sm:$0x1] %vm416, 0.0
        %424 = vst.msk [vmem:[#allocation3 + $0x70] sm:$0x1] %vm416, 0.0
        %425 = vst.msk [vmem:[#allocation3 + $0x80] sm:$0x1] %vm416, 0.0
        %426 = vst.msk [vmem:[#allocation3 + $0x90] sm:$0x1] %vm416, 0.0
        %427 = vst.msk [vmem:[#allocation3 + $0x9] sm:$0x1] %vm416, 0.0
        %428 = vst.msk [vmem:[#allocation3 + $0x19] sm:$0x1] %vm416, 0.0
        %429 = vst.msk [vmem:[#allocation3 + $0x29] sm:$0x1] %vm416, 0.0
        %430 = vst.msk [vmem:[#allocation3 + $0x39] sm:$0x1] %vm416, 0.0
        %431 = vst.msk [vmem:[#allocation3 + $0x49] sm:$0x1] %vm416, 0.0
        %432 = vst.msk [vmem:[#allocation3 + $0x59] sm:$0x1] %vm416, 0.0
        %433 = vst.msk [vmem:[#allocation3 + $0x69] sm:$0x1] %vm416, 0.0
        %434 = vst.msk [vmem:[#allocation3 + $0x79] sm:$0x1] %vm416, 0.0
        %435 = vst.msk [vmem:[#allocation3 + $0x89] sm:$0x1] %vm416, 0.0
        %436 = vst.msk [vmem:[#allocation3 + $0x99] sm:$0x1] %vm416, 0.0
        %s437 = scalar_lea.vmem [#allocation2], 16
        %438 = vst.msk [vmem:[%s437 + $0x1] sm:$0xff] %vm381, %v373
        %439 = vst.msk [vmem:[%s437 + $0x11] sm:$0xff] %vm381, %v374
        %440 = vst.msk [vmem:[%s437 + $0x21] sm:$0xff] %vm381, %v375
        %441 = vst.msk [vmem:[%s437 + $0x31] sm:$0xff] %vm381, %v376
        %442 = vst.msk [vmem:[%s437 + $0x41] sm:$0xff] %vm381, %v377
        %443 = vst.msk [vmem:[%s437 + $0x51] sm:$0xff] %vm381, %v378
        %444 = vst.msk [vmem:[%s437 + $0x61] sm:$0xff] %vm381, %v379
        %445 = vst.msk [vmem:[%s437 + $0x71] sm:$0xff] %vm381, %v380
        %v446 = vld [vmem:[#allocation2] sm:$0xff]
        %v447 = vld [vmem:[#allocation2 + $0x10] sm:$0xff]
        %v448 = vld [vmem:[#allocation2 + $0x20] sm:$0xff]
        %v449 = vld [vmem:[#allocation2 + $0x30] sm:$0xff]
        %v450 = vld [vmem:[#allocation2 + $0x40] sm:$0xff]
        %v451 = vld [vmem:[#allocation2 + $0x50] sm:$0xff]
        %v452 = vld [vmem:[#allocation2 + $0x60] sm:$0xff]
        %v453 = vld [vmem:[#allocation2 + $0x70] sm:$0xff]
        %v454 = vld [vmem:[#allocation2 + $0x1] sm:$0xff]
        %v455 = vld [vmem:[#allocation2 + $0x11] sm:$0xff]
        %v456 = vld [vmem:[#allocation2 + $0x21] sm:$0xff]
        %v457 = vld [vmem:[#allocation2 + $0x31] sm:$0xff]
        %v458 = vld [vmem:[#allocation2 + $0x41] sm:$0xff]
        %v459 = vld [vmem:[#allocation2 + $0x51] sm:$0xff]
        %v460 = vld [vmem:[#allocation2 + $0x61] sm:$0xff]
        %v461 = vld [vmem:[#allocation2 + $0x71] sm:$0xff]
        %v462 = vld [vmem:[#allocation2 + $0x2] sm:$0xff]
        %v463 = vld [vmem:[#allocation2 + $0x12] sm:$0xff]
        %v464 = vld [vmem:[#allocation2 + $0x22] sm:$0xff]
        %v465 = vld [vmem:[#allocation2 + $0x32] sm:$0xff]
        %v466 = vld [vmem:[#allocation2 + $0x42] sm:$0xff]
        %v467 = vld [vmem:[#allocation2 + $0x52] sm:$0xff]
        %v468 = vld [vmem:[#allocation2 + $0x62] sm:$0xff]
        %v469 = vld [vmem:[#allocation2 + $0x72] sm:$0xff]
        %v470 = vld [vmem:[%s437] sm:$0xff]
        %v471 = vld [vmem:[%s437 + $0x10] sm:$0xff]
        %v472 = vld [vmem:[%s437 + $0x20] sm:$0xff]
        %v473 = vld [vmem:[%s437 + $0x30] sm:$0xff]
        %v474 = vld [vmem:[%s437 + $0x40] sm:$0xff]
        %v475 = vld [vmem:[%s437 + $0x50] sm:$0xff]
        %v476 = vld [vmem:[%s437 + $0x60] sm:$0xff]
        %v477 = vld [vmem:[%s437 + $0x70] sm:$0xff]
        %v478 = vld [vmem:[%s437 + $0x1] sm:$0xff]
        %v479 = vld [vmem:[%s437 + $0x11] sm:$0xff]
        %v480 = vld [vmem:[%s437 + $0x21] sm:$0xff]
        %v481 = vld [vmem:[%s437 + $0x31] sm:$0xff]
        %v482 = vld [vmem:[%s437 + $0x41] sm:$0xff]
        %v483 = vld [vmem:[%s437 + $0x51] sm:$0xff]
        %v484 = vld [vmem:[%s437 + $0x61] sm:$0xff]
        %v485 = vld [vmem:[%s437 + $0x71] sm:$0xff]
        %v486 = vld [vmem:[%s437 + $0x2] sm:$0xff]
        %v487 = vld [vmem:[%s437 + $0x12] sm:$0xff]
        %v488 = vld [vmem:[%s437 + $0x22] sm:$0xff]
        %v489 = vld [vmem:[%s437 + $0x32] sm:$0xff]
        %v490 = vld [vmem:[%s437 + $0x42] sm:$0xff]
        %v491 = vld [vmem:[%s437 + $0x52] sm:$0xff]
        %v492 = vld [vmem:[%s437 + $0x62] sm:$0xff]
        %v493 = vld [vmem:[%s437 + $0x72] sm:$0xff]
        %s494 = scalar_lea.vmem [#allocation2], 32
        %v495 = vld [vmem:[%s494] sm:$0xff]
        %v496 = vld [vmem:[%s494 + $0x10] sm:$0xff]
        %v497 = vld [vmem:[%s494 + $0x20] sm:$0xff]
        %v498 = vld [vmem:[%s494 + $0x30] sm:$0xff]
        %v499 = vld [vmem:[%s494 + $0x40] sm:$0xff]
        %v500 = vld [vmem:[%s494 + $0x50] sm:$0xff]
        %v501 = vld [vmem:[%s494 + $0x60] sm:$0xff]
        %v502 = vld [vmem:[%s494 + $0x70] sm:$0xff]
        %v503 = vld [vmem:[%s494 + $0x1] sm:$0xff]
        %v504 = vld [vmem:[%s494 + $0x11] sm:$0xff]
        %v505 = vld [vmem:[%s494 + $0x21] sm:$0xff]
        %v506 = vld [vmem:[%s494 + $0x31] sm:$0xff]
        %v507 = vld [vmem:[%s494 + $0x41] sm:$0xff]
        %v508 = vld [vmem:[%s494 + $0x51] sm:$0xff]
        %v509 = vld [vmem:[%s494 + $0x61] sm:$0xff]
        %v510 = vld [vmem:[%s494 + $0x71] sm:$0xff]
        %v511 = vld [vmem:[%s494 + $0x2] sm:$0xff]
        %v512 = vld [vmem:[%s494 + $0x12] sm:$0xff]
        %v513 = vld [vmem:[%s494 + $0x22] sm:$0xff]
        %v514 = vld [vmem:[%s494 + $0x32] sm:$0xff]
        %v515 = vld [vmem:[%s494 + $0x42] sm:$0xff]
        %v516 = vld [vmem:[%s494 + $0x52] sm:$0xff]
        %v517 = vld [vmem:[%s494 + $0x62] sm:$0xff]
        %v518 = vld [vmem:[%s494 + $0x72] sm:$0xff]
        %527 = vrot.lane.b32.xlu0 %v454, 4
        %v528 = vpop.permute.xlu0 %527
        %529 = vrot.lane.b32.xlu0 %v455, 4
        %v530 = vpop.permute.xlu0 %529
        %531 = vrot.lane.b32.xlu0 %v456, 4
        %v532 = vpop.permute.xlu0 %531
        %533 = vrot.lane.b32.xlu0 %v457, 4
        %v534 = vpop.permute.xlu0 %533
        %535 = vrot.lane.b32.xlu0 %v458, 4
        %v536 = vpop.permute.xlu0 %535
        %537 = vrot.lane.b32.xlu0 %v459, 4
        %v538 = vpop.permute.xlu0 %537
        %539 = vrot.lane.b32.xlu0 %v460, 4
        %v540 = vpop.permute.xlu0 %539
        %541 = vrot.lane.b32.xlu0 %v461, 4
        %v542 = vpop.permute.xlu0 %541
        %559 = vrot.lane.b32.xlu0 %v462, 8
        %v560 = vpop.permute.xlu0 %559
        %561 = vrot.lane.b32.xlu0 %v463, 8
        %v562 = vpop.permute.xlu0 %561
        %563 = vrot.lane.b32.xlu0 %v464, 8
        %v564 = vpop.permute.xlu0 %563
        %565 = vrot.lane.b32.xlu0 %v465, 8
        %v566 = vpop.permute.xlu0 %565
        %567 = vrot.lane.b32.xlu0 %v466, 8
        %v568 = vpop.permute.xlu0 %567
        %569 = vrot.lane.b32.xlu0 %v467, 8
        %v570 = vpop.permute.xlu0 %569
        %571 = vrot.lane.b32.xlu0 %v468, 8
        %v572 = vpop.permute.xlu0 %571
        %573 = vrot.lane.b32.xlu0 %v469, 8
        %v574 = vpop.permute.xlu0 %573
        %591 = vrot.lane.b32.xlu0 %v470, 12
        %v592 = vpop.permute.xlu0 %591
        %593 = vrot.lane.b32.xlu0 %v471, 12
        %v594 = vpop.permute.xlu0 %593
        %595 = vrot.lane.b32.xlu0 %v472, 12
        %v596 = vpop.permute.xlu0 %595
        %597 = vrot.lane.b32.xlu0 %v473, 12
        %v598 = vpop.permute.xlu0 %597
        %599 = vrot.lane.b32.xlu0 %v474, 12
        %v600 = vpop.permute.xlu0 %599
        %601 = vrot.lane.b32.xlu0 %v475, 12
        %v602 = vpop.permute.xlu0 %601
        %603 = vrot.lane.b32.xlu0 %v476, 12
        %v604 = vpop.permute.xlu0 %603
        %605 = vrot.lane.b32.xlu0 %v477, 12
        %v606 = vpop.permute.xlu0 %605
        %623 = vrot.lane.b32.xlu0 %v478, 16
        %v624 = vpop.permute.xlu0 %623
        %625 = vrot.lane.b32.xlu0 %v479, 16
        %v626 = vpop.permute.xlu0 %625
        %627 = vrot.lane.b32.xlu0 %v480, 16
        %v628 = vpop.permute.xlu0 %627
        %629 = vrot.lane.b32.xlu0 %v481, 16
        %v630 = vpop.permute.xlu0 %629
        %631 = vrot.lane.b32.xlu0 %v482, 16
        %v632 = vpop.permute.xlu0 %631
        %633 = vrot.lane.b32.xlu0 %v483, 16
        %v634 = vpop.permute.xlu0 %633
        %635 = vrot.lane.b32.xlu0 %v484, 16
        %v636 = vpop.permute.xlu0 %635
        %637 = vrot.lane.b32.xlu0 %v485, 16
        %v638 = vpop.permute.xlu0 %637
        %655 = vrot.lane.b32.xlu0 %v486, 20
        %v656 = vpop.permute.xlu0 %655
        %657 = vrot.lane.b32.xlu0 %v487, 20
        %v658 = vpop.permute.xlu0 %657
        %659 = vrot.lane.b32.xlu0 %v488, 20
        %v660 = vpop.permute.xlu0 %659
        %661 = vrot.lane.b32.xlu0 %v489, 20
        %v662 = vpop.permute.xlu0 %661
        %663 = vrot.lane.b32.xlu0 %v490, 20
        %v664 = vpop.permute.xlu0 %663
        %665 = vrot.lane.b32.xlu0 %v491, 20
        %v666 = vpop.permute.xlu0 %665
        %667 = vrot.lane.b32.xlu0 %v492, 20
        %v668 = vpop.permute.xlu0 %667
        %669 = vrot.lane.b32.xlu0 %v493, 20
        %v670 = vpop.permute.xlu0 %669
        %687 = vrot.lane.b32.xlu0 %v495, 24
        %v688 = vpop.permute.xlu0 %687
        %689 = vrot.lane.b32.xlu0 %v496, 24
        %v690 = vpop.permute.xlu0 %689
        %691 = vrot.lane.b32.xlu0 %v497, 24
        %v692 = vpop.permute.xlu0 %691
        %693 = vrot.lane.b32.xlu0 %v498, 24
        %v694 = vpop.permute.xlu0 %693
        %695 = vrot.lane.b32.xlu0 %v499, 24
        %v696 = vpop.permute.xlu0 %695
        %697 = vrot.lane.b32.xlu0 %v500, 24
        %v698 = vpop.permute.xlu0 %697
        %699 = vrot.lane.b32.xlu0 %v501, 24
        %v700 = vpop.permute.xlu0 %699
        %701 = vrot.lane.b32.xlu0 %v502, 24
        %v702 = vpop.permute.xlu0 %701
        %719 = vrot.lane.b32.xlu0 %v503, 28
        %v720 = vpop.permute.xlu0 %719
        %721 = vrot.lane.b32.xlu0 %v504, 28
        %v722 = vpop.permute.xlu0 %721
        %723 = vrot.lane.b32.xlu0 %v505, 28
        %v724 = vpop.permute.xlu0 %723
        %725 = vrot.lane.b32.xlu0 %v506, 28
        %v726 = vpop.permute.xlu0 %725
        %727 = vrot.lane.b32.xlu0 %v507, 28
        %v728 = vpop.permute.xlu0 %727
        %729 = vrot.lane.b32.xlu0 %v508, 28
        %v730 = vpop.permute.xlu0 %729
        %731 = vrot.lane.b32.xlu0 %v509, 28
        %v732 = vpop.permute.xlu0 %731
        %733 = vrot.lane.b32.xlu0 %v510, 28
        %v734 = vpop.permute.xlu0 %733
        %751 = vrot.lane.b32.xlu0 %v511, 32
        %v752 = vpop.permute.xlu0 %751
        %753 = vrot.lane.b32.xlu0 %v512, 32
        %v754 = vpop.permute.xlu0 %753
        %755 = vrot.lane.b32.xlu0 %v513, 32
        %v756 = vpop.permute.xlu0 %755
        %757 = vrot.lane.b32.xlu0 %v514, 32
        %v758 = vpop.permute.xlu0 %757
        %759 = vrot.lane.b32.xlu0 %v515, 32
        %v760 = vpop.permute.xlu0 %759
        %761 = vrot.lane.b32.xlu0 %v516, 32
        %v762 = vpop.permute.xlu0 %761
        %763 = vrot.lane.b32.xlu0 %v517, 32
        %v764 = vpop.permute.xlu0 %763
        %765 = vrot.lane.b32.xlu0 %v518, 32
        %v766 = vpop.permute.xlu0 %765
        %v775 = vsel %vm381, %v446, %v528
        %v776 = vsel %vm381, %v447, %v530
        %v777 = vsel %vm381, %v448, %v532
        %v778 = vsel %vm381, %v449, %v534
        %v779 = vsel %vm381, %v450, %v536
        %v780 = vsel %vm381, %v451, %v538
        %v781 = vsel %vm381, %v452, %v540
        %v782 = vsel %vm381, %v453, %v542
        %v783 = vsel %vm409, %v775, %v560
        %v784 = vsel %vm409, %v776, %v562
        %v785 = vsel %vm409, %v777, %v564
        %v786 = vsel %vm409, %v778, %v566
        %v787 = vsel %vm409, %v779, %v568
        %v788 = vsel %vm409, %v780, %v570
        %v789 = vsel %vm409, %v781, %v572
        %v790 = vsel %vm409, %v782, %v574
        %vm791 = vcmask 97280
        %v792 = vsel %vm791, %v783, %v592
        %v793 = vsel %vm791, %v784, %v594
        %v794 = vsel %vm791, %v785, %v596
        %v795 = vsel %vm791, %v786, %v598
        %v796 = vsel %vm791, %v787, %v600
        %v797 = vsel %vm791, %v788, %v602
        %v798 = vsel %vm791, %v789, %v604
        %v799 = vsel %vm791, %v790, %v606
        %vm800 = vcmask 130048
        %v801 = vsel %vm800, %v792, %v624
        %v802 = vsel %vm800, %v793, %v626
        %v803 = vsel %vm800, %v794, %v628
        %v804 = vsel %vm800, %v795, %v630
        %v805 = vsel %vm800, %v796, %v632
        %v806 = vsel %vm800, %v797, %v634
        %v807 = vsel %vm800, %v798, %v636
        %v808 = vsel %vm800, %v799, %v638
        %vm809 = vcmask 162816
        %v810 = vsel %vm809, %v801, %v656
        %v811 = vsel %vm809, %v802, %v658
        %v812 = vsel %vm809, %v803, %v660
        %v813 = vsel %vm809, %v804, %v662
        %v814 = vsel %vm809, %v805, %v664
        %v815 = vsel %vm809, %v806, %v666
        %v816 = vsel %vm809, %v807, %v668
        %v817 = vsel %vm809, %v808, %v670
        %vm818 = vcmask 195584
        %v819 = vsel %vm818, %v810, %v688
        %v820 = vsel %vm818, %v811, %v690
        %v821 = vsel %vm818, %v812, %v692
        %v822 = vsel %vm818, %v813, %v694
        %v823 = vsel %vm818, %v814, %v696
        %v824 = vsel %vm818, %v815, %v698
        %v825 = vsel %vm818, %v816, %v700
        %v826 = vsel %vm818, %v817, %v702
        %vm827 = vcmask 228352
        %v828 = vsel %vm827, %v819, %v720
        %v829 = vsel %vm827, %v820, %v722
        %v830 = vsel %vm827, %v821, %v724
        %v831 = vsel %vm827, %v822, %v726
        %v832 = vsel %vm827, %v823, %v728
        %v833 = vsel %vm827, %v824, %v730
        %v834 = vsel %vm827, %v825, %v732
        %v835 = vsel %vm827, %v826, %v734
        %vm836 = vcmask 261120
        %v837 = vsel %vm836, %v828, %v752
        %v838 = vsel %vm836, %v829, %v754
        %v839 = vsel %vm836, %v830, %v756
        %v840 = vsel %vm836, %v831, %v758
        %v841 = vsel %vm836, %v832, %v760
        %v842 = vsel %vm836, %v833, %v762
        %v843 = vsel %vm836, %v834, %v764
        %v844 = vsel %vm836, %v835, %v766
        %v845 = vld [vmem:[%s1] sm:$0xff]
        %v846 = vld [vmem:[%s1 + $0x8] sm:$0xff]
        %v847 = vld [vmem:[%s1 + $0x10] sm:$0xff]
        %v848 = vld [vmem:[%s1 + $0x18] sm:$0xff]
        %v849 = vld [vmem:[%s1 + $0x20] sm:$0xf]
        %vm850 = vcmask 293888
        %v852 = vsel %vm850, %v837, 0
        %v855 = vsel %vm850, %v838, 0
        %v858 = vsel %vm850, %v839, 0
        %v861 = vsel %vm850, %v840, 0
        %v864 = vsel %vm850, %v841, 0
        %v867 = vsel %vm850, %v842, 0
        %v870 = vsel %vm850, %v843, 0
        %v873 = vsel %vm850, %v844, 0
        %vm875 = vcmask 1043456
        %v877 = vsel %vm875, %v849, 0
        %879 = vmatpush.msra.mxu0 0.0
        %880 = vmatpush.msra.mxu0 0.0
        %881 = vmatpush.msra.mxu0 0.0
        %882 = vmatpush.msra.mxu0 0.0
        %883 = vmatpush.msra.mxu0 0.0
        %884 = vmatpush.msra.mxu0 0.0
        %885 = vmatpush.msra.mxu0 0.0
        %886 = vmatpush.msra.mxu0 0.0
        %887 = vmatpush.msra.mxu0 0.0
        %888 = vmatpush.msra.mxu0 0.0
        %889 = vmatpush.msra.mxu0 0.0
        %890 = vmatpush.msra.mxu0 %v877
        %891 = vmatpush.msra.mxu0 %v848
        %892 = vmatpush.msra.mxu0 %v847
        %893 = vmatpush.msra.mxu0 %v846
        %894 = vmatpush.msra.mxu0 %v845
        %895 = vmatmul.f32.gmra.mxu0 %v852
        %v896 = vpop.f32.mrf.mxu0
        %v897 = vadd.f32 0.0, %v896
        %898 = vmatmul.f32.gmra.mxu0 %v855
        %v899 = vpop.f32.mrf.mxu0
        %v900 = vadd.f32 0.0, %v899
        %901 = vmatmul.f32.gmra.mxu0 %v858
        %v902 = vpop.f32.mrf.mxu0
        %v903 = vadd.f32 0.0, %v902
        %904 = vmatmul.f32.gmra.mxu0 %v861
        %v905 = vpop.f32.mrf.mxu0
        %v906 = vadd.f32 0.0, %v905
        %907 = vmatmul.f32.gmra.mxu0 %v864
        %v908 = vpop.f32.mrf.mxu0
        %v909 = vadd.f32 0.0, %v908
        %910 = vmatmul.f32.gmra.mxu0 %v867
        %v911 = vpop.f32.mrf.mxu0
        %v912 = vadd.f32 0.0, %v911
        %913 = vmatmul.f32.gmra.mxu0 %v870
        %v914 = vpop.f32.mrf.mxu0
        %v915 = vadd.f32 0.0, %v914
        %916 = vmatmul.f32.gmra.mxu0 %v873
        %v917 = vpop.f32.mrf.mxu0
        %v918 = vadd.f32 0.0, %v917
        %919 = vdwg.mxu0
        %v920 = vld [vmem:[%s2] sm:$0x1]
        %v922 = vperm.slane %v920, 0
        %v924 = vmul.f32 %v897, %v922
        %v925 = vmul.f32 %v900, %v922
        %v926 = vmul.f32 %v903, %v922
        %v927 = vmul.f32 %v906, %v922
        %v928 = vmul.f32 %v909, %v922
        %v929 = vmul.f32 %v912, %v922
        %v930 = vmul.f32 %v915, %v922
        %v931 = vmul.f32 %v918, %v922
        %v932 = vld [vmem:[%s3] sm:$0x1]
        %v934 = vperm.slane %v932, 0
        %v936 = vadd.f32 %v924, %v934
        %v937 = vadd.f32 %v925, %v934
        %v938 = vadd.f32 %v926, %v934
        %v939 = vadd.f32 %v927, %v934
        %v940 = vadd.f32 %v928, %v934
        %v941 = vadd.f32 %v929, %v934
        %v942 = vadd.f32 %v930, %v934
        %v943 = vadd.f32 %v931, %v934
        %v944 = vmax.f32 %v936, 0.0
        %v945 = vmax.f32 %v937, 0.0
        %v946 = vmax.f32 %v938, 0.0
        %v947 = vmax.f32 %v939, 0.0
        %v948 = vmax.f32 %v940, 0.0
        %v949 = vmax.f32 %v941, 0.0
        %v950 = vmax.f32 %v942, 0.0
        %v951 = vmax.f32 %v943, 0.0
        %s952 = scalar_lea.vmem [#allocation3], 16
        %953 = vst.msk [vmem:[%s952 + $0x1] sm:$0xff] %vm409, %v944
        %954 = vst.msk [vmem:[%s952 + $0x11] sm:$0xff] %vm409, %v945
        %955 = vst.msk [vmem:[%s952 + $0x21] sm:$0xff] %vm409, %v946
        %956 = vst.msk [vmem:[%s952 + $0x31] sm:$0xff] %vm409, %v947
        %957 = vst.msk [vmem:[%s952 + $0x41] sm:$0xff] %vm409, %v948
        %958 = vst.msk [vmem:[%s952 + $0x51] sm:$0xff] %vm409, %v949
        %959 = vst.msk [vmem:[%s952 + $0x61] sm:$0xff] %vm409, %v950
        %960 = vst.msk [vmem:[%s952 + $0x71] sm:$0xff] %vm409, %v951
        %v961 = vld [vmem:[#allocation3] sm:$0xff]
        %v962 = vld [vmem:[#allocation3 + $0x10] sm:$0xff]
        %v963 = vld [vmem:[#allocation3 + $0x20] sm:$0xff]
        %v964 = vld [vmem:[#allocation3 + $0x30] sm:$0xff]
        %v965 = vld [vmem:[#allocation3 + $0x40] sm:$0xff]
        %v966 = vld [vmem:[#allocation3 + $0x50] sm:$0xff]
        %v967 = vld [vmem:[#allocation3 + $0x60] sm:$0xff]
        %v968 = vld [vmem:[#allocation3 + $0x70] sm:$0xff]
        %v969 = vld [vmem:[#allocation3 + $0x1] sm:$0xff]
        %v970 = vld [vmem:[#allocation3 + $0x11] sm:$0xff]
        %v971 = vld [vmem:[#allocation3 + $0x21] sm:$0xff]
        %v972 = vld [vmem:[#allocation3 + $0x31] sm:$0xff]
        %v973 = vld [vmem:[#allocation3 + $0x41] sm:$0xff]
        %v974 = vld [vmem:[#allocation3 + $0x51] sm:$0xff]
        %v975 = vld [vmem:[#allocation3 + $0x61] sm:$0xff]
        %v976 = vld [vmem:[#allocation3 + $0x71] sm:$0xff]
        %v977 = vld [vmem:[#allocation3 + $0x2] sm:$0xff]
        %v978 = vld [vmem:[#allocation3 + $0x12] sm:$0xff]
        %v979 = vld [vmem:[#allocation3 + $0x22] sm:$0xff]
        %v980 = vld [vmem:[#allocation3 + $0x32] sm:$0xff]
        %v981 = vld [vmem:[#allocation3 + $0x42] sm:$0xff]
        %v982 = vld [vmem:[#allocation3 + $0x52] sm:$0xff]
        %v983 = vld [vmem:[#allocation3 + $0x62] sm:$0xff]
        %v984 = vld [vmem:[#allocation3 + $0x72] sm:$0xff]
        %v985 = vld [vmem:[%s952] sm:$0xff]
        %v986 = vld [vmem:[%s952 + $0x10] sm:$0xff]
        %v987 = vld [vmem:[%s952 + $0x20] sm:$0xff]
        %v988 = vld [vmem:[%s952 + $0x30] sm:$0xff]
        %v989 = vld [vmem:[%s952 + $0x40] sm:$0xff]
        %v990 = vld [vmem:[%s952 + $0x50] sm:$0xff]
        %v991 = vld [vmem:[%s952 + $0x60] sm:$0xff]
        %v992 = vld [vmem:[%s952 + $0x70] sm:$0xff]
        %v993 = vld [vmem:[%s952 + $0x1] sm:$0xff]
        %v994 = vld [vmem:[%s952 + $0x11] sm:$0xff]
        %v995 = vld [vmem:[%s952 + $0x21] sm:$0xff]
        %v996 = vld [vmem:[%s952 + $0x31] sm:$0xff]
        %v997 = vld [vmem:[%s952 + $0x41] sm:$0xff]
        %v998 = vld [vmem:[%s952 + $0x51] sm:$0xff]
        %v999 = vld [vmem:[%s952 + $0x61] sm:$0xff]
        %v1000 = vld [vmem:[%s952 + $0x71] sm:$0xff]
        %v1001 = vld [vmem:[%s952 + $0x2] sm:$0xff]
        %v1002 = vld [vmem:[%s952 + $0x12] sm:$0xff]
        %v1003 = vld [vmem:[%s952 + $0x22] sm:$0xff]
        %v1004 = vld [vmem:[%s952 + $0x32] sm:$0xff]
        %v1005 = vld [vmem:[%s952 + $0x42] sm:$0xff]
        %v1006 = vld [vmem:[%s952 + $0x52] sm:$0xff]
        %v1007 = vld [vmem:[%s952 + $0x62] sm:$0xff]
        %v1008 = vld [vmem:[%s952 + $0x72] sm:$0xff]
        %s1009 = scalar_lea.vmem [#allocation3], 32
        %v1010 = vld [vmem:[%s1009] sm:$0xff]
        %v1011 = vld [vmem:[%s1009 + $0x10] sm:$0xff]
        %v1012 = vld [vmem:[%s1009 + $0x20] sm:$0xff]
        %v1013 = vld [vmem:[%s1009 + $0x30] sm:$0xff]
        %v1014 = vld [vmem:[%s1009 + $0x40] sm:$0xff]
        %v1015 = vld [vmem:[%s1009 + $0x50] sm:$0xff]
        %v1016 = vld [vmem:[%s1009 + $0x60] sm:$0xff]
        %v1017 = vld [vmem:[%s1009 + $0x70] sm:$0xff]
        %v1018 = vld [vmem:[%s1009 + $0x1] sm:$0xff]
        %v1019 = vld [vmem:[%s1009 + $0x11] sm:$0xff]
        %v1020 = vld [vmem:[%s1009 + $0x21] sm:$0xff]
        %v1021 = vld [vmem:[%s1009 + $0x31] sm:$0xff]
        %v1022 = vld [vmem:[%s1009 + $0x41] sm:$0xff]
        %v1023 = vld [vmem:[%s1009 + $0x51] sm:$0xff]
        %v1024 = vld [vmem:[%s1009 + $0x61] sm:$0xff]
        %v1025 = vld [vmem:[%s1009 + $0x71] sm:$0xff]
        %v1026 = vld [vmem:[%s1009 + $0x2] sm:$0xff]
        %v1027 = vld [vmem:[%s1009 + $0x12] sm:$0xff]
        %v1028 = vld [vmem:[%s1009 + $0x22] sm:$0xff]
        %v1029 = vld [vmem:[%s1009 + $0x32] sm:$0xff]
        %v1030 = vld [vmem:[%s1009 + $0x42] sm:$0xff]
        %v1031 = vld [vmem:[%s1009 + $0x52] sm:$0xff]
        %v1032 = vld [vmem:[%s1009 + $0x62] sm:$0xff]
        %v1033 = vld [vmem:[%s1009 + $0x72] sm:$0xff]
        %1042 = vrot.lane.b32.xlu0 %v969, 8
        %v1043 = vpop.permute.xlu0 %1042
        %1044 = vrot.lane.b32.xlu0 %v970, 8
        %v1045 = vpop.permute.xlu0 %1044
        %1046 = vrot.lane.b32.xlu0 %v971, 8
        %v1047 = vpop.permute.xlu0 %1046
        %1048 = vrot.lane.b32.xlu0 %v972, 8
        %v1049 = vpop.permute.xlu0 %1048
        %1050 = vrot.lane.b32.xlu0 %v973, 8
        %v1051 = vpop.permute.xlu0 %1050
        %1052 = vrot.lane.b32.xlu0 %v974, 8
        %v1053 = vpop.permute.xlu0 %1052
        %1054 = vrot.lane.b32.xlu0 %v975, 8
        %v1055 = vpop.permute.xlu0 %1054
        %1056 = vrot.lane.b32.xlu0 %v976, 8
        %v1057 = vpop.permute.xlu0 %1056
        %1074 = vrot.lane.b32.xlu0 %v977, 16
        %v1075 = vpop.permute.xlu0 %1074
        %1076 = vrot.lane.b32.xlu0 %v978, 16
        %v1077 = vpop.permute.xlu0 %1076
        %1078 = vrot.lane.b32.xlu0 %v979, 16
        %v1079 = vpop.permute.xlu0 %1078
        %1080 = vrot.lane.b32.xlu0 %v980, 16
        %v1081 = vpop.permute.xlu0 %1080
        %1082 = vrot.lane.b32.xlu0 %v981, 16
        %v1083 = vpop.permute.xlu0 %1082
        %1084 = vrot.lane.b32.xlu0 %v982, 16
        %v1085 = vpop.permute.xlu0 %1084
        %1086 = vrot.lane.b32.xlu0 %v983, 16
        %v1087 = vpop.permute.xlu0 %1086
        %1088 = vrot.lane.b32.xlu0 %v984, 16
        %v1089 = vpop.permute.xlu0 %1088
        %1106 = vrot.lane.b32.xlu0 %v985, 24
        %v1107 = vpop.permute.xlu0 %1106
        %1108 = vrot.lane.b32.xlu0 %v986, 24
        %v1109 = vpop.permute.xlu0 %1108
        %1110 = vrot.lane.b32.xlu0 %v987, 24
        %v1111 = vpop.permute.xlu0 %1110
        %1112 = vrot.lane.b32.xlu0 %v988, 24
        %v1113 = vpop.permute.xlu0 %1112
        %1114 = vrot.lane.b32.xlu0 %v989, 24
        %v1115 = vpop.permute.xlu0 %1114
        %1116 = vrot.lane.b32.xlu0 %v990, 24
        %v1117 = vpop.permute.xlu0 %1116
        %1118 = vrot.lane.b32.xlu0 %v991, 24
        %v1119 = vpop.permute.xlu0 %1118
        %1120 = vrot.lane.b32.xlu0 %v992, 24
        %v1121 = vpop.permute.xlu0 %1120
        %1138 = vrot.lane.b32.xlu0 %v993, 32
        %v1139 = vpop.permute.xlu0 %1138
        %1140 = vrot.lane.b32.xlu0 %v994, 32
        %v1141 = vpop.permute.xlu0 %1140
        %1142 = vrot.lane.b32.xlu0 %v995, 32
        %v1143 = vpop.permute.xlu0 %1142
        %1144 = vrot.lane.b32.xlu0 %v996, 32
        %v1145 = vpop.permute.xlu0 %1144
        %1146 = vrot.lane.b32.xlu0 %v997, 32
        %v1147 = vpop.permute.xlu0 %1146
        %1148 = vrot.lane.b32.xlu0 %v998, 32
        %v1149 = vpop.permute.xlu0 %1148
        %1150 = vrot.lane.b32.xlu0 %v999, 32
        %v1151 = vpop.permute.xlu0 %1150
        %1152 = vrot.lane.b32.xlu0 %v1000, 32
        %v1153 = vpop.permute.xlu0 %1152
        %1170 = vrot.lane.b32.xlu0 %v1001, 40
        %v1171 = vpop.permute.xlu0 %1170
        %1172 = vrot.lane.b32.xlu0 %v1002, 40
        %v1173 = vpop.permute.xlu0 %1172
        %1174 = vrot.lane.b32.xlu0 %v1003, 40
        %v1175 = vpop.permute.xlu0 %1174
        %1176 = vrot.lane.b32.xlu0 %v1004, 40
        %v1177 = vpop.permute.xlu0 %1176
        %1178 = vrot.lane.b32.xlu0 %v1005, 40
        %v1179 = vpop.permute.xlu0 %1178
        %1180 = vrot.lane.b32.xlu0 %v1006, 40
        %v1181 = vpop.permute.xlu0 %1180
        %1182 = vrot.lane.b32.xlu0 %v1007, 40
        %v1183 = vpop.permute.xlu0 %1182
        %1184 = vrot.lane.b32.xlu0 %v1008, 40
        %v1185 = vpop.permute.xlu0 %1184
        %1202 = vrot.lane.b32.xlu0 %v1010, 48
        %v1203 = vpop.permute.xlu0 %1202
        %1204 = vrot.lane.b32.xlu0 %v1011, 48
        %v1205 = vpop.permute.xlu0 %1204
        %1206 = vrot.lane.b32.xlu0 %v1012, 48
        %v1207 = vpop.permute.xlu0 %1206
        %1208 = vrot.lane.b32.xlu0 %v1013, 48
        %v1209 = vpop.permute.xlu0 %1208
        %1210 = vrot.lane.b32.xlu0 %v1014, 48
        %v1211 = vpop.permute.xlu0 %1210
        %1212 = vrot.lane.b32.xlu0 %v1015, 48
        %v1213 = vpop.permute.xlu0 %1212
        %1214 = vrot.lane.b32.xlu0 %v1016, 48
        %v1215 = vpop.permute.xlu0 %1214
        %1216 = vrot.lane.b32.xlu0 %v1017, 48
        %v1217 = vpop.permute.xlu0 %1216
        %1234 = vrot.lane.b32.xlu0 %v1018, 56
        %v1235 = vpop.permute.xlu0 %1234
        %1236 = vrot.lane.b32.xlu0 %v1019, 56
        %v1237 = vpop.permute.xlu0 %1236
        %1238 = vrot.lane.b32.xlu0 %v1020, 56
        %v1239 = vpop.permute.xlu0 %1238
        %1240 = vrot.lane.b32.xlu0 %v1021, 56
        %v1241 = vpop.permute.xlu0 %1240
        %1242 = vrot.lane.b32.xlu0 %v1022, 56
        %v1243 = vpop.permute.xlu0 %1242
        %1244 = vrot.lane.b32.xlu0 %v1023, 56
        %v1245 = vpop.permute.xlu0 %1244
        %1246 = vrot.lane.b32.xlu0 %v1024, 56
        %v1247 = vpop.permute.xlu0 %1246
        %1248 = vrot.lane.b32.xlu0 %v1025, 56
        %v1249 = vpop.permute.xlu0 %1248
        %1266 = vrot.lane.b32.xlu0 %v1026, 64
        %v1267 = vpop.permute.xlu0 %1266
        %1268 = vrot.lane.b32.xlu0 %v1027, 64
        %v1269 = vpop.permute.xlu0 %1268
        %1270 = vrot.lane.b32.xlu0 %v1028, 64
        %v1271 = vpop.permute.xlu0 %1270
        %1272 = vrot.lane.b32.xlu0 %v1029, 64
        %v1273 = vpop.permute.xlu0 %1272
        %1274 = vrot.lane.b32.xlu0 %v1030, 64
        %v1275 = vpop.permute.xlu0 %1274
        %1276 = vrot.lane.b32.xlu0 %v1031, 64
        %v1277 = vpop.permute.xlu0 %1276
        %1278 = vrot.lane.b32.xlu0 %v1032, 64
        %v1279 = vpop.permute.xlu0 %1278
        %1280 = vrot.lane.b32.xlu0 %v1033, 64
        %v1281 = vpop.permute.xlu0 %1280
        %v1290 = vsel %vm409, %v961, %v1043
        %v1291 = vsel %vm409, %v962, %v1045
        %v1292 = vsel %vm409, %v963, %v1047
        %v1293 = vsel %vm409, %v964, %v1049
        %v1294 = vsel %vm409, %v965, %v1051
        %v1295 = vsel %vm409, %v966, %v1053
        %v1296 = vsel %vm409, %v967, %v1055
        %v1297 = vsel %vm409, %v968, %v1057
        %v1298 = vsel %vm800, %v1290, %v1075
        %v1299 = vsel %vm800, %v1291, %v1077
        %v1300 = vsel %vm800, %v1292, %v1079
        %v1301 = vsel %vm800, %v1293, %v1081
        %v1302 = vsel %vm800, %v1294, %v1083
        %v1303 = vsel %vm800, %v1295, %v1085
        %v1304 = vsel %vm800, %v1296, %v1087
        %v1305 = vsel %vm800, %v1297, %v1089
        %v1306 = vsel %vm818, %v1298, %v1107
        %v1307 = vsel %vm818, %v1299, %v1109
        %v1308 = vsel %vm818, %v1300, %v1111
        %v1309 = vsel %vm818, %v1301, %v1113
        %v1310 = vsel %vm818, %v1302, %v1115
        %v1311 = vsel %vm818, %v1303, %v1117
        %v1312 = vsel %vm818, %v1304, %v1119
        %v1313 = vsel %vm818, %v1305, %v1121
        %v1314 = vsel %vm836, %v1306, %v1139
        %v1315 = vsel %vm836, %v1307, %v1141
        %v1316 = vsel %vm836, %v1308, %v1143
        %v1317 = vsel %vm836, %v1309, %v1145
        %v1318 = vsel %vm836, %v1310, %v1147
        %v1319 = vsel %vm836, %v1311, %v1149
        %v1320 = vsel %vm836, %v1312, %v1151
        %v1321 = vsel %vm836, %v1313, %v1153
        %vm1322 = vcmask 326656
        %v1323 = vsel %vm1322, %v1314, %v1171
        %v1324 = vsel %vm1322, %v1315, %v1173
        %v1325 = vsel %vm1322, %v1316, %v1175
        %v1326 = vsel %vm1322, %v1317, %v1177
        %v1327 = vsel %vm1322, %v1318, %v1179
        %v1328 = vsel %vm1322, %v1319, %v1181
        %v1329 = vsel %vm1322, %v1320, %v1183
        %v1330 = vsel %vm1322, %v1321, %v1185
        %vm1331 = vcmask 392192
        %v1332 = vsel %vm1331, %v1323, %v1203
        %v1333 = vsel %vm1331, %v1324, %v1205
        %v1334 = vsel %vm1331, %v1325, %v1207
        %v1335 = vsel %vm1331, %v1326, %v1209
        %v1336 = vsel %vm1331, %v1327, %v1211
        %v1337 = vsel %vm1331, %v1328, %v1213
        %v1338 = vsel %vm1331, %v1329, %v1215
        %v1339 = vsel %vm1331, %v1330, %v1217
        %vm1340 = vcmask 457728
        %v1341 = vsel %vm1340, %v1332, %v1235
        %v1342 = vsel %vm1340, %v1333, %v1237
        %v1343 = vsel %vm1340, %v1334, %v1239
        %v1344 = vsel %vm1340, %v1335, %v1241
        %v1345 = vsel %vm1340, %v1336, %v1243
        %v1346 = vsel %vm1340, %v1337, %v1245
        %v1347 = vsel %vm1340, %v1338, %v1247
        %v1348 = vsel %vm1340, %v1339, %v1249
        %vm1349 = vcmask 523264
        %v1350 = vsel %vm1349, %v1341, %v1267
        %v1351 = vsel %vm1349, %v1342, %v1269
        %v1352 = vsel %vm1349, %v1343, %v1271
        %v1353 = vsel %vm1349, %v1344, %v1273
        %v1354 = vsel %vm1349, %v1345, %v1275
        %v1355 = vsel %vm1349, %v1346, %v1277
        %v1356 = vsel %vm1349, %v1347, %v1279
        %v1357 = vsel %vm1349, %v1348, %v1281
        %v1358 = vld [vmem:[%s4] sm:$0xff]
        %v1359 = vld [vmem:[%s4 + $0x8] sm:$0xff]
        %v1360 = vld [vmem:[%s4 + $0x10] sm:$0xff]
        %v1361 = vld [vmem:[%s4 + $0x18] sm:$0xff]
        %v1362 = vld [vmem:[%s4 + $0x20] sm:$0xff]
        %v1363 = vld [vmem:[%s4 + $0x28] sm:$0xff]
        %v1364 = vld [vmem:[%s4 + $0x30] sm:$0xff]
        %v1365 = vld [vmem:[%s4 + $0x38] sm:$0xff]
        %v1366 = vld [vmem:[%s4 + $0x40] sm:$0xff]
        %vm1367 = vcmask 588800
        %v1369 = vsel %vm1367, %v1350, 0
        %v1372 = vsel %vm1367, %v1351, 0
        %v1375 = vsel %vm1367, %v1352, 0
        %v1378 = vsel %vm1367, %v1353, 0
        %v1381 = vsel %vm1367, %v1354, 0
        %v1384 = vsel %vm1367, %v1355, 0
        %v1387 = vsel %vm1367, %v1356, 0
        %v1390 = vsel %vm1367, %v1357, 0
        %1392 = vmatpush.msra.mxu0 0.0
        %1393 = vmatpush.msra.mxu0 0.0
        %1394 = vmatpush.msra.mxu0 0.0
        %1395 = vmatpush.msra.mxu0 0.0
        %1396 = vmatpush.msra.mxu0 0.0
        %1397 = vmatpush.msra.mxu0 0.0
        %1398 = vmatpush.msra.mxu0 0.0
        %1399 = vmatpush.msra.mxu0 %v1366
        %1400 = vmatpush.msra.mxu0 %v1365
        %1401 = vmatpush.msra.mxu0 %v1364
        %1402 = vmatpush.msra.mxu0 %v1363
        %1403 = vmatpush.msra.mxu0 %v1362
        %1404 = vmatpush.msra.mxu0 %v1361
        %1405 = vmatpush.msra.mxu0 %v1360
        %1406 = vmatpush.msra.mxu0 %v1359
        %1407 = vmatpush.msra.mxu0 %v1358
        %1408 = vmatmul.f32.gmra.mxu0 %v1369
        %v1409 = vpop.f32.mrf.mxu0
        %v1410 = vadd.f32 0.0, %v1409
        %1411 = vmatmul.f32.gmra.mxu0 %v1372
        %v1412 = vpop.f32.mrf.mxu0
        %v1413 = vadd.f32 0.0, %v1412
        %1414 = vmatmul.f32.gmra.mxu0 %v1375
        %v1415 = vpop.f32.mrf.mxu0
        %v1416 = vadd.f32 0.0, %v1415
        %1417 = vmatmul.f32.gmra.mxu0 %v1378
        %v1418 = vpop.f32.mrf.mxu0
        %v1419 = vadd.f32 0.0, %v1418
        %1420 = vmatmul.f32.gmra.mxu0 %v1381
        %v1421 = vpop.f32.mrf.mxu0
        %v1422 = vadd.f32 0.0, %v1421
        %1423 = vmatmul.f32.gmra.mxu0 %v1384
        %v1424 = vpop.f32.mrf.mxu0
        %v1425 = vadd.f32 0.0, %v1424
        %1426 = vmatmul.f32.gmra.mxu0 %v1387
        %v1427 = vpop.f32.mrf.mxu0
        %v1428 = vadd.f32 0.0, %v1427
        %1429 = vmatmul.f32.gmra.mxu0 %v1390
        %v1430 = vpop.f32.mrf.mxu0
        %v1431 = vadd.f32 0.0, %v1430
        %1432 = vdwg.mxu0
        %v1433 = vld [vmem:[%s5] sm:$0x1]
        %v1435 = vperm.slane %v1433, 0
        %v1437 = vmul.f32 %v1410, %v1435
        %v1438 = vmul.f32 %v1413, %v1435
        %v1439 = vmul.f32 %v1416, %v1435
        %v1440 = vmul.f32 %v1419, %v1435
        %v1441 = vmul.f32 %v1422, %v1435
        %v1442 = vmul.f32 %v1425, %v1435
        %v1443 = vmul.f32 %v1428, %v1435
        %v1444 = vmul.f32 %v1431, %v1435
        %v1445 = vld [vmem:[%s6] sm:$0x1]
        %v1447 = vperm.slane %v1445, 0
        %v1449 = vadd.f32 %v1437, %v1447
        %v1450 = vadd.f32 %v1438, %v1447
        %v1451 = vadd.f32 %v1439, %v1447
        %v1452 = vadd.f32 %v1440, %v1447
        %v1453 = vadd.f32 %v1441, %v1447
        %v1454 = vadd.f32 %v1442, %v1447
        %v1455 = vadd.f32 %v1443, %v1447
        %v1456 = vadd.f32 %v1444, %v1447
        %v1457 = vmax.f32 %v1449, 0.0
        %v1458 = vmax.f32 %v1450, 0.0
        %v1459 = vmax.f32 %v1451, 0.0
        %v1460 = vmax.f32 %v1452, 0.0
        %v1461 = vmax.f32 %v1453, 0.0
        %v1462 = vmax.f32 %v1454, 0.0
        %v1463 = vmax.f32 %v1455, 0.0
        %v1464 = vmax.f32 %v1456, 0.0
        %1465 = vst.msk [vmem:[%s271] sm:$0xff] %vm409, %v1457
        %1466 = vst.msk [vmem:[%s271 + $0x8] sm:$0xff] %vm409, %v1458
        %1467 = vst.msk [vmem:[%s271 + $0x10] sm:$0xff] %vm409, %v1459
        %1468 = vst.msk [vmem:[%s271 + $0x18] sm:$0xff] %vm409, %v1460
        %1469 = vst.msk [vmem:[%s271 + $0x20] sm:$0xff] %vm409, %v1461
        %1470 = vst.msk [vmem:[%s271 + $0x28] sm:$0xff] %vm409, %v1462
        %1471 = vst.msk [vmem:[%s271 + $0x30] sm:$0xff] %vm409, %v1463
        %1472 = vst.msk [vmem:[%s271 + $0x38] sm:$0xff] %vm409, %v1464
        %s1473 = sand.u32 %s181, 1
        %s1474 = scalar_lea.sflag [#allocation5], %s1473
        %s1475 = sand.u32 %s181, 1
        %s1476 = smul.addr %s1475, 64
        %s1477 = scalar_lea.vmem [#allocation4], %s1476
        // Predicated region
        $region49: #{tpu_custom_call.1} parent=47 // pred_check
          %p1478 = pneg %p191
        $region50: #{tpu_custom_call.1} parent=47 // pred_check_branch
          %1480 = sbr.rel (%p1478) target = $region52
        $region51: #{tpu_custom_call.1} parent=47 // pred_region
          %1482 = vsyncadd %s1474, 0
          %s1483 = smul.addr %s21, 8
          %s1484 = smul.addr %s1483, 8
          %s1485 = scalar_lea.hbm %s7, %s1484
          %s1486 = sshll.u32 %s1477, 4
          %s1487 = int_to_ptr.vmem [resolvable:$true] %s1486
          %s1488 = sshll.u32 %s1485, 4
          %s1489 = int_to_ptr.hbm [resolvable:$true] %s1488
          %1494 = dma.vmem_to_hbm [thread:$0]  %s1487, 1024, %s1489, %s1474, 128, 128, 8
        $region52: #{tpu_custom_call.1} parent=47 // pred_fallthru
          _
      $region48: #{tpu_custom_call.1} parent=5 // pred_fallthru
        _
      %p1495 = scmp.le.s32.totalorder 2, %s16
      // Predicated region
      $region53: #{tpu_custom_call.1} parent=5 // pred_check
        %p1496 = pneg %p1495
      $region54: #{tpu_custom_call.1} parent=5 // pred_check_branch
        %1498 = sbr.rel (%p1496) target = $region56
      $region55: #{tpu_custom_call.1} parent=5 // pred_region
        %s1499 = ssub.s32 %s16, 2
        // Predicated region
        $region57: #{tpu_custom_call.1} parent=55 // pred_check
          %p1500 = pneg %p197
        $region58: #{tpu_custom_call.1} parent=55 // pred_check_branch
          %1502 = sbr.rel (%p1500) target = $region60
        $region59: #{tpu_custom_call.1} parent=55 // pred_region
          %s1503 = sand.u32 %s182, 1
          %s1504 = scalar_lea.sflag [#allocation5], %s1503
          %s1505 = sand.u32 %s182, 1
          %s1506 = smul.addr %s1505, 64
          %s1507 = scalar_lea.vmem [#allocation4], %s1506
          %1509 = dma.done %s1504, 1024
        $region60: #{tpu_custom_call.1} parent=55 // pred_fallthru
          _
      $region56: #{tpu_custom_call.1} parent=5 // pred_fallthru
        _
    $region6: #{tpu_custom_call.1} parent=1 // loop_footer
      %s20 = sadd.s32 1, %s16
    $region7: #{tpu_custom_call.1} parent=1 // loop_footer_branch
      %15 = sbr.rel target = $region3
    $region8: #{tpu_custom_call.1} parent=1 // loop_exit
      _
    %1510 = vsyncpa [#allocation5], 1
    %s1511 = scalar_lea.sflag [#allocation5], 1
    %1512 = vsyncpa %s1511, 1

</llo_original>
